<compile_context>
chip_gen: v7x
topology: tpu7x:2x2x1
jax: 0.10.0
libtpu: 0.0.40
codegen_flags: <defaults>
</compile_context>

<pallas_src>
import functools

import jax
import jax.numpy as jnp
from jax import lax
from jax.experimental import pallas as pl
from jax.experimental.pallas import tpu as pltpu

# ----------------------------- problem sizes (small demo) -----------------------------
NUM_BAGS = 4    # MIL bags batched through the grid axis
B = 16          # number of segments / data points per bag
D_IN = 32       # input feature dim fed to the feature extractor
HID = 64        # MLP hidden width
NUM_DIM = 8     # GP tasks == feature dims produced by the extractor
GRID_SIZE = 32  # inducing grid points (module default is 100; kept small for the demo)
GRID_BOUNDS = (-100.0, 100.0)
MEAN_PAD = 128  # lane-dense padding of the (B, NUM_DIM) mean output


# ------------------------------ fused DKL forward kernel -------------------------------
def _dkl_fused_kernel(x_ref, w1_ref, w2e_ref, consts_ref, a_ref, rsel_ref, mask_ref,
                      mean_ref, covar_ref, *, lb, ub, inv_h, num_dim, grid_size, hid):
    nd = num_dim
    g = grid_size
    dg = nd * g

    grid_t = consts_ref[0:1, :]          # (1, D*G)   tiled inducing grid
    b2e = consts_ref[1:2, :]             # (1, D*G)   b2 folded with the task expansion
    b1 = consts_ref[2:3, :hid]           # (1, HID)

    # ---- feature extractor: fused 2-layer MLP (f32 MXU); w2 is pre-folded with the
    #      one-hot task expansion, so fE[i, d*G + j] = f[i, d] directly ----
    h = jnp.dot(x_ref[...], w1_ref[...], preferred_element_type=jnp.float32) + b1
    h = jnp.maximum(h, 0.0)
    fE = jnp.dot(h, w2e_ref[...], preferred_element_type=jnp.float32) + b2e   # (B, D*G)

    # ---- gpytorch.utils.grid.scale_to_bounds (per-bag min/max affine).
    #      min/max over the replicated slab fE equals min/max over the raw features. ----
    fmin = jnp.min(fE, keepdims=True)
    fmax = jnp.max(fE, keepdims=True)
    fE = (fE - fmin) * (0.95 * (ub - lb) / (fmax - fmin)) + 0.95 * lb

    # ---- Keys cubic interpolation weights for ALL tasks, (B, D*G), f32 VPU ----
    u = jnp.abs(fE - grid_t) * inv_h
    w_near = ((1.5 * u - 2.5) * u) * u + 1.0
    w_far = ((-0.5 * u + 2.5) * u - 4.0) * u + 2.0
    W = jnp.where(u < 1.0, w_near, jnp.where(u < 2.0, w_far, 0.0))            # (B, D*G)

    # ---- one bf16 MXU matmul gives every per-task (W_d L_d) row AND the multitask mean:
    #      a_ref = [ blockdiag(L_0..L_{D-1}) | m-columns zero-padded to 128 ] ----
    wlm = jnp.dot(W.astype(jnp.bfloat16), a_ref[...],
                  preferred_element_type=jnp.float32)                         # (B, D*G+128)
    mean_ref[...] = wlm[:, dg:]                        # lane-dense (B, 128) store
    wl = wlm[:, :dg].astype(jnp.bfloat16)              # wl[i, d*G+h] = (W_d L_d)[i, h]

    # ---- expand to interleaved rows r = i*D + d (MultitaskMVN layout) via the
    #      precomputed one-hot selector, mask to the own-task block, then ONE lane-dense
    #      (B*D, B*D) MXU Gram = interleaved multitask covariance ----
    wl_rows = jnp.dot(rsel_ref[...], wl, preferred_element_type=jnp.float32)  # (B*D, D*G)
    wl_int = (wl_rows * mask_ref[...]).astype(jnp.bfloat16)                   # (B*D, D*G)
    covar_ref[...] = lax.dot_general(wl_int, wl_int, (((1,), (1,)), ((), ())),
                                     preferred_element_type=jnp.float32)      # (B*D, B*D)


# ------------------- one-time packing of parameters for the fused kernel ---------------
def pack_params(params, grid_pts, bag_size):
    """Re-layout of model parameters (done once, outside the forward pass)."""
    num_dim, grid_size = params["var_chol"].shape[0], params["var_chol"].shape[1]
    dg = num_dim * grid_size
    hid = params["w1"].shape[1]

    # One-hot task-replication matrix: expand[d, d*G + j] = 1.
    e_col = jnp.arange(dg, dtype=jnp.int32)[None, :] // grid_size
    e_row = jnp.arange(num_dim, dtype=jnp.int32)[:, None]
    expand = (e_col == e_row).astype(jnp.float32)                             # (D, D*G)

    w2e = jnp.dot(params["w2"], expand)                                       # (HID, D*G)
    b2e = jnp.dot(params["b2"], expand)                                       # (1, D*G)
    grid_tile = jnp.tile(grid_pts, (1, num_dim))                              # (1, D*G)
    b1_pad = jnp.zeros((1, dg), jnp.float32).at[:, :hid].set(params["b1"])
    consts = jnp.concatenate([grid_tile, b2e, b1_pad], axis=0)                # (3, D*G)

    # Block-diagonal variational Cholesky + mean columns (zero-padded to 128 lanes), bf16.
    eye_d = jnp.eye(num_dim, dtype=jnp.float32)
    blockdiag_l = (eye_d[:, None, :, None] * params["var_chol"][:, :, None, :]
                   ).reshape(dg, dg)                                          # (D*G, D*G)
    m = params["var_mean"][:, 0, :]                                           # (D, G)
    m_cols = (m[:, :, None] * eye_d[:, None, :]).reshape(dg, num_dim)         # (D*G, D)
    m_pad = jnp.zeros((dg, MEAN_PAD), jnp.float32).at[:, :num_dim].set(m_cols)
    a_aug = jnp.concatenate([blockdiag_l, m_pad], axis=1).astype(jnp.bfloat16)

    # Static interleave selector and own-task block mask (exact 0/1 values in bf16).
    bd = bag_size * num_dim
    r_pt = jnp.arange(bd, dtype=jnp.int32)[:, None] // num_dim
    rsel = (r_pt == jnp.arange(bag_size, dtype=jnp.int32)[None, :]
            ).astype(jnp.bfloat16)                                            # (B*D, B)
    m_task = jnp.arange(bd, dtype=jnp.int32)[:, None] % num_dim
    m_blk = jnp.arange(dg, dtype=jnp.int32)[None, :] // grid_size
    mask = (m_task == m_blk).astype(jnp.bfloat16)                             # (B*D, D*G)

    return dict(w1=params["w1"], w2e=w2e, consts=consts, a_aug=a_aug,
                rsel=rsel, mask=mask)


# ------------------------------------ DKL forward ---------------------------------------
def dkl_forward(x, packed, lb, ub, inv_h, *, bag_size, num_dim, grid_size, hid):
    total = x.shape[0]
    num_bags = total // bag_size
    dg = num_dim * grid_size
    bd = bag_size * num_dim

    def const(a):  # VMEM-resident across the bag grid (constant block index).
        return pl.BlockSpec(a.shape, lambda i: (0,) * a.ndim)

    out_shapes = (jax.ShapeDtypeStruct((total, MEAN_PAD), jnp.float32),
                  jax.ShapeDtypeStruct((num_bags * bd, bd), jnp.float32))

    mean_pad, covar = pl.pallas_call(
        functools.partial(_dkl_fused_kernel, lb=lb, ub=ub, inv_h=inv_h,
                          num_dim=num_dim, grid_size=grid_size, hid=hid),
        out_shape=out_shapes,
        grid=(num_bags,),
        in_specs=[pl.BlockSpec((bag_size, x.shape[1]), lambda i: (i, 0)),
                  const(packed["w1"]), const(packed["w2e"]), const(packed["consts"]),
                  const(packed["a_aug"]), const(packed["rsel"]), const(packed["mask"])],
        out_specs=(pl.BlockSpec((bag_size, MEAN_PAD), lambda i: (i, 0)),
                   pl.BlockSpec((bd, bd), lambda i: (i, 0))),
        compiler_params=pltpu.CompilerParams(dimension_semantics=("parallel",)),
    )(x, packed["w1"], packed["w2e"], packed["consts"], packed["a_aug"],
      packed["rsel"], packed["mask"])

    mean = mean_pad[:, :num_dim].reshape(num_bags, bag_size, num_dim)
    covar = covar.reshape(num_bags, bd, bd)
    return mean, covar          # (bags, B, num_dim), (bags, B*num_dim, B*num_dim)


# ------------------------------- pure-JAX reference (one bag) ---------------------------
def dkl_forward_ref(x, p, lb, ub, inv_h):
    hp = lax.Precision.HIGHEST
    h = jnp.maximum(jnp.dot(x, p["w1"], precision=hp) + p["b1"], 0.0)
    f = jnp.dot(h, p["w2"], precision=hp) + p["b2"]
    fmin, fmax = f.min(), f.max()
    f = (f - fmin) * (0.95 * (ub - lb) / (fmax - fmin)) + 0.95 * lb
    z = f.T[..., None]                                               # (num_dim, B, 1)
    u = jnp.abs(z - p["grid"][None]) * inv_h                         # (num_dim, B, G)
    w_near = ((1.5 * u - 2.5) * u) * u + 1.0
    w_far = ((-0.5 * u + 2.5) * u - 4.0) * u + 2.0
    W = jnp.where(u < 1.0, w_near, jnp.where(u < 2.0, w_far, 0.0))
    mean = jnp.einsum("dng,dg->dn", W, p["var_mean"][:, 0, :], precision=hp)
    WL = jnp.einsum("dng,dgh->dnh", W, p["var_chol"], precision=hp)
    covar = jnp.einsum("dnh,dmh->dnm", WL, WL, precision=hp)
    n, num_dim = mean.shape[1], mean.shape[0]
    eye = jnp.eye(num_dim, dtype=covar.dtype)
    mt_covar = jnp.einsum("dij,de->idje", covar, eye).reshape(n * num_dim, n * num_dim)
    return mean.T, mt_covar


# ----------------------------------------- main -----------------------------------------
if __name__ == "__main__":
    lb, ub = GRID_BOUNDS
    # Inducing grid (matches GridInterpolationVariationalStrategy construction).
    grid_diff = (ub - lb) / (GRID_SIZE - 2)
    lo, hi = lb - grid_diff, ub + grid_diff
    grid_pts = jnp.linspace(lo, hi, GRID_SIZE, dtype=jnp.float32).reshape(1, GRID_SIZE)
    inv_h = float((GRID_SIZE - 1) / (hi - lo))

    key = jax.random.PRNGKey(0)
    kx, k1, k2, k3, k4, k5, k6 = jax.random.split(key, 7)
    x = jax.random.normal(kx, (NUM_BAGS * B, D_IN), jnp.float32)

    params = {
        "w1": 0.2 * jax.random.normal(k1, (D_IN, HID), jnp.float32),
        "b1": 0.1 * jax.random.normal(k2, (1, HID), jnp.float32),
        "w2": 0.2 * jax.random.normal(k3, (HID, NUM_DIM), jnp.float32),
        "b2": 0.1 * jax.random.normal(k4, (1, NUM_DIM), jnp.float32),
        # CholeskyVariationalDistribution params (batch_shape = [NUM_DIM]).
        "var_mean": 0.5 * jax.random.normal(k5, (NUM_DIM, 1, GRID_SIZE), jnp.float32),
        "var_chol": (jnp.tril(0.05 * jax.random.normal(k6, (NUM_DIM, GRID_SIZE, GRID_SIZE),
                                                       jnp.float32))
                     + jnp.eye(GRID_SIZE, dtype=jnp.float32)[None]),
        "grid": grid_pts,
    }
    packed = pack_params(params, grid_pts, B)

    mt_mean, mt_covar = dkl_forward(x, packed, lb, ub, inv_h,
                                    bag_size=B, num_dim=NUM_DIM,
                                    grid_size=GRID_SIZE, hid=HID)
    jax.block_until_ready((mt_mean, mt_covar))

    assert mt_mean.shape == (NUM_BAGS, B, NUM_DIM)
    assert mt_covar.shape == (NUM_BAGS, B * NUM_DIM, B * NUM_DIM)

    # Tolerance relaxed vs. the f32 reference because the two heavy matmuls now run with
    # bf16 MXU operands (f32 accumulation), per the performance review; the bf16 operand
    # rounding bound is well inside 3e-2 for these magnitudes.
    for bag in range(NUM_BAGS):
        ref_mean, ref_covar = dkl_forward_ref(x[bag * B:(bag + 1) * B], params, lb, ub, inv_h)
        assert jnp.allclose(mt_mean[bag], ref_mean, rtol=3e-2, atol=3e-2)
        assert jnp.allclose(mt_covar[bag], ref_covar, rtol=3e-2, atol=3e-2)

    print("KERNEL_OK")
</pallas_src>

<mosaic_0001>
module attributes {stable_mosaic.version = 11 : i64} {
  func.func @_dkl_fused_kernel(%arg0: i32, %arg1: memref<16x32xf32, #tpu.memory_space<vmem>>, %arg2: memref<32x64xf32, #tpu.memory_space<vmem>>, %arg3: memref<64x256xf32, #tpu.memory_space<vmem>>, %arg4: memref<3x256xf32, #tpu.memory_space<vmem>>, %arg5: memref<256x384xbf16, #tpu.memory_space<vmem>>, %arg6: memref<128x16xbf16, #tpu.memory_space<vmem>>, %arg7: memref<128x256xbf16, #tpu.memory_space<vmem>>, %arg8: memref<16x128xf32, #tpu.memory_space<vmem>>, %arg9: memref<128x128xf32, #tpu.memory_space<vmem>>) attributes {dimension_semantics = [#tpu.dimension_semantics<parallel>], iteration_bounds = array<i64: 4>, scalar_prefetch = 0 : i64, scratch_operands = 0 : i64, tpu.core_type = #tpu.core_type<tc>, window_params = [{transform_indices = @transform_0, window_bounds = array<i64: 16, 32>}, {pipeline_mode = #tpu.pipeline_mode<synchronous>, transform_indices = @transform_1, window_bounds = array<i64: 32, 64>}, {pipeline_mode = #tpu.pipeline_mode<synchronous>, transform_indices = @transform_2, window_bounds = array<i64: 64, 256>}, {pipeline_mode = #tpu.pipeline_mode<synchronous>, transform_indices = @transform_3, window_bounds = array<i64: 3, 256>}, {pipeline_mode = #tpu.pipeline_mode<synchronous>, transform_indices = @transform_4, window_bounds = array<i64: 256, 384>}, {pipeline_mode = #tpu.pipeline_mode<synchronous>, transform_indices = @transform_5, window_bounds = array<i64: 128, 16>}, {pipeline_mode = #tpu.pipeline_mode<synchronous>, transform_indices = @transform_6, window_bounds = array<i64: 128, 256>}, {transform_indices = @transform_7, window_bounds = array<i64: 16, 128>}, {transform_indices = @transform_8, window_bounds = array<i64: 128, 128>}]} {
    %c0 = arith.constant 0 : index
    %c0_0 = arith.constant 0 : index
    %0 = vector.load %arg4[%c0, %c0_0] : memref<3x256xf32, #tpu.memory_space<vmem>>, vector<1x256xf32>
    %c1 = arith.constant 1 : index
    %c0_1 = arith.constant 0 : index
    %1 = vector.load %arg4[%c1, %c0_1] : memref<3x256xf32, #tpu.memory_space<vmem>>, vector<1x256xf32>
    %c2 = arith.constant 2 : index
    %c0_2 = arith.constant 0 : index
    %2 = vector.load %arg4[%c2, %c0_2] : memref<3x256xf32, #tpu.memory_space<vmem>>, vector<1x64xf32>
    %c0_3 = arith.constant 0 : index
    %c0_4 = arith.constant 0 : index
    %3 = vector.load %arg1[%c0_3, %c0_4] : memref<16x32xf32, #tpu.memory_space<vmem>>, vector<16x32xf32>
    %c0_5 = arith.constant 0 : index
    %c0_6 = arith.constant 0 : index
    %4 = vector.load %arg2[%c0_5, %c0_6] : memref<32x64xf32, #tpu.memory_space<vmem>>, vector<32x64xf32>
    %cst = arith.constant dense<0.000000e+00> : vector<16x64xf32>
    %5 = tpu.matmul %3, %4, %cst {dimension_numbers = #tpu.dot_dimension_numbers<[1], [0], [0], [1], [0, 0, 1, 1], [], []>} : vector<16x32xf32>, vector<32x64xf32>, vector<16x64xf32> -> vector<16x64xf32>
    %6 = vector.broadcast %2 : vector<1x64xf32> to vector<16x64xf32>
    %7 = arith.addf %5, %6 : vector<16x64xf32>
    %cst_7 = arith.constant 0.000000e+00 : f32
    %8 = vector.broadcast %cst_7 : f32 to vector<16x64xf32>
    %9 = arith.maximumf %7, %8 : vector<16x64xf32>
    %c0_8 = arith.constant 0 : index
    %c0_9 = arith.constant 0 : index
    %10 = vector.load %arg3[%c0_8, %c0_9] : memref<64x256xf32, #tpu.memory_space<vmem>>, vector<64x256xf32>
    %cst_10 = arith.constant dense<0.000000e+00> : vector<16x256xf32>
    %11 = tpu.matmul %9, %10, %cst_10 {dimension_numbers = #tpu.dot_dimension_numbers<[1], [0], [0], [1], [0, 0, 1, 1], [], []>} : vector<16x64xf32>, vector<64x256xf32>, vector<16x256xf32> -> vector<16x256xf32>
    %12 = vector.broadcast %1 : vector<1x256xf32> to vector<16x256xf32>
    %13 = arith.addf %11, %12 : vector<16x256xf32>
    %14 = vector.shape_cast %13 : vector<16x256xf32> to vector<1x16x256xf32>
    %cst_11 = arith.constant dense<0x7F800000> : vector<1xf32>
    %15 = vector.multi_reduction <minimumf>, %14, %cst_11 [1, 2] : vector<1x16x256xf32> to vector<1xf32>
    %16 = vector.shape_cast %15 : vector<1xf32> to vector<1x1x1xf32>
    %17 = vector.extract %16[0, 0, 0] : f32 from vector<1x1x1xf32>
    %18 = vector.broadcast %17 : f32 to vector<1x1xf32>
    %19 = vector.shape_cast %13 : vector<16x256xf32> to vector<1x16x256xf32>
    %cst_12 = arith.constant dense<0xFF800000> : vector<1xf32>
    %20 = vector.multi_reduction <maximumf>, %19, %cst_12 [1, 2] : vector<1x16x256xf32> to vector<1xf32>
    %21 = vector.shape_cast %20 : vector<1xf32> to vector<1x1x1xf32>
    %22 = vector.extract %21[0, 0, 0] : f32 from vector<1x1x1xf32>
    %23 = vector.broadcast %22 : f32 to vector<1x1xf32>
    %24 = vector.broadcast %18 : vector<1x1xf32> to vector<16x256xf32>
    %25 = arith.subf %13, %24 : vector<16x256xf32>
    %26 = arith.subf %23, %18 : vector<1x1xf32>
    %cst_13 = arith.constant 1.900000e+02 : f32
    %27 = vector.broadcast %cst_13 : f32 to vector<1x1xf32>
    %28 = arith.divf %27, %26 : vector<1x1xf32>
    %29 = vector.broadcast %28 : vector<1x1xf32> to vector<16x256xf32>
    %30 = arith.mulf %25, %29 : vector<16x256xf32>
    %cst_14 = arith.constant -9.500000e+01 : f32
    %31 = vector.broadcast %cst_14 : f32 to vector<16x256xf32>
    %32 = arith.addf %30, %31 : vector<16x256xf32>
    %33 = vector.broadcast %0 : vector<1x256xf32> to vector<16x256xf32>
    %34 = arith.subf %32, %33 : vector<16x256xf32>
    %35 = math.absf %34 : vector<16x256xf32>
    %cst_15 = arith.constant 0.145312503 : f32
    %36 = vector.broadcast %cst_15 : f32 to vector<16x256xf32>
    %37 = arith.mulf %35, %36 : vector<16x256xf32>
    %cst_16 = arith.constant 1.500000e+00 : f32
    %38 = vector.broadcast %cst_16 : f32 to vector<16x256xf32>
    %39 = arith.mulf %38, %37 : vector<16x256xf32>
    %cst_17 = arith.constant 2.500000e+00 : f32
    %40 = vector.broadcast %cst_17 : f32 to vector<16x256xf32>
    %41 = arith.subf %39, %40 : vector<16x256xf32>
    %42 = arith.mulf %41, %37 : vector<16x256xf32>
    %43 = arith.mulf %42, %37 : vector<16x256xf32>
    %cst_18 = arith.constant 1.000000e+00 : f32
    %44 = vector.broadcast %cst_18 : f32 to vector<16x256xf32>
    %45 = arith.addf %43, %44 : vector<16x256xf32>
    %cst_19 = arith.constant -5.000000e-01 : f32
    %46 = vector.broadcast %cst_19 : f32 to vector<16x256xf32>
    %47 = arith.mulf %46, %37 : vector<16x256xf32>
    %cst_20 = arith.constant 2.500000e+00 : f32
    %48 = vector.broadcast %cst_20 : f32 to vector<16x256xf32>
    %49 = arith.addf %47, %48 : vector<16x256xf32>
    %50 = arith.mulf %49, %37 : vector<16x256xf32>
    %cst_21 = arith.constant 4.000000e+00 : f32
    %51 = vector.broadcast %cst_21 : f32 to vector<16x256xf32>
    %52 = arith.subf %50, %51 : vector<16x256xf32>
    %53 = arith.mulf %52, %37 : vector<16x256xf32>
    %cst_22 = arith.constant 2.000000e+00 : f32
    %54 = vector.broadcast %cst_22 : f32 to vector<16x256xf32>
    %55 = arith.addf %53, %54 : vector<16x256xf32>
    %cst_23 = arith.constant 1.000000e+00 : f32
    %56 = vector.broadcast %cst_23 : f32 to vector<16x256xf32>
    %57 = arith.cmpf olt, %37, %56 : vector<16x256xf32>
    %cst_24 = arith.constant 2.000000e+00 : f32
    %58 = vector.broadcast %cst_24 : f32 to vector<16x256xf32>
    %59 = arith.cmpf olt, %37, %58 : vector<16x256xf32>
    %cst_25 = arith.constant 0.000000e+00 : f32
    %60 = vector.broadcast %cst_25 : f32 to vector<16x256xf32>
    %61 = arith.select %59, %55, %60 : vector<16x256xi1>, vector<16x256xf32>
    %62 = arith.select %57, %45, %61 : vector<16x256xi1>, vector<16x256xf32>
    %63 = arith.truncf %62 : vector<16x256xf32> to vector<16x256xbf16>
    %c0_26 = arith.constant 0 : index
    %c0_27 = arith.constant 0 : index
    %64 = vector.load %arg5[%c0_26, %c0_27] : memref<256x384xbf16, #tpu.memory_space<vmem>>, vector<256x384xbf16>
    %cst_28 = arith.constant dense<0.000000e+00> : vector<16x384xf32>
    %65 = tpu.matmul %63, %64, %cst_28 {dimension_numbers = #tpu.dot_dimension_numbers<[1], [0], [0], [1], [0, 0, 1, 1], [], []>} : vector<16x256xbf16>, vector<256x384xbf16>, vector<16x384xf32> -> vector<16x384xf32>
    %66 = vector.extract_strided_slice %65 {offsets = [0, 256], sizes = [16, 128], strides = [1, 1]} : vector<16x384xf32> to vector<16x128xf32>
    %c0_29 = arith.constant 0 : index
    %c0_30 = arith.constant 0 : index
    %67 = vector.load %arg8[%c0_29, %c0_30] : memref<16x128xf32, #tpu.memory_space<vmem>>, vector<16x128xf32>
    tpu.vector_store %arg8[%c0_29, %c0_30], %66 {strides = array<i32>} : memref<16x128xf32, #tpu.memory_space<vmem>>, vector<16x128xf32>,
    %68 = vector.extract_strided_slice %65 {offsets = [0, 0], sizes = [16, 256], strides = [1, 1]} : vector<16x384xf32> to vector<16x256xf32>
    %69 = arith.truncf %68 : vector<16x256xf32> to vector<16x256xbf16>
    %c0_31 = arith.constant 0 : index
    %c0_32 = arith.constant 0 : index
    %70 = vector.load %arg6[%c0_31, %c0_32] : memref<128x16xbf16, #tpu.memory_space<vmem>>, vector<128x16xbf16>
    %cst_33 = arith.constant dense<0.000000e+00> : vector<128x256xf32>
    %71 = tpu.matmul %70, %69, %cst_33 {dimension_numbers = #tpu.dot_dimension_numbers<[1], [0], [0], [1], [0, 0, 1, 1], [], []>} : vector<128x16xbf16>, vector<16x256xbf16>, vector<128x256xf32> -> vector<128x256xf32>
    %c0_34 = arith.constant 0 : index
    %c0_35 = arith.constant 0 : index
    %72 = vector.load %arg7[%c0_34, %c0_35] : memref<128x256xbf16, #tpu.memory_space<vmem>>, vector<128x256xbf16>
    %73 = arith.extf %72 : vector<128x256xbf16> to vector<128x256xf32>
    %74 = arith.mulf %71, %73 : vector<128x256xf32>
    %75 = arith.truncf %74 : vector<128x256xf32> to vector<128x256xbf16>
    %cst_36 = arith.constant dense<0.000000e+00> : vector<128x128xf32>
    %76 = tpu.matmul %75, %75, %cst_36 {dimension_numbers = #tpu.dot_dimension_numbers<[1], [1], [0], [0], [0, 0, 1, 0], [], []>} : vector<128x256xbf16>, vector<128x256xbf16>, vector<128x128xf32> -> vector<128x128xf32>
    %c0_37 = arith.constant 0 : index
    %c0_38 = arith.constant 0 : index
    %77 = vector.load %arg9[%c0_37, %c0_38] : memref<128x128xf32, #tpu.memory_space<vmem>>, vector<128x128xf32>
    tpu.vector_store %arg9[%c0_37, %c0_38], %76 {strides = array<i32>} : memref<128x128xf32, #tpu.memory_space<vmem>>, vector<128x128xf32>,
    return
  }
  func.func @transform_0(%arg0: i32) -> (i32, i32) {
    %c0_i32 = arith.constant 0 : i32
    %c0_i32_0 = arith.constant 0 : i32
    return %arg0, %c0_i32 : i32, i32
  }
  func.func @transform_1(%arg0: i32) -> (i32, i32) {
    %c0_i32 = arith.constant 0 : i32
    %c0_i32_0 = arith.constant 0 : i32
    %c0_i32_1 = arith.constant 0 : i32
    return %c0_i32, %c0_i32_0 : i32, i32
  }
  func.func @transform_2(%arg0: i32) -> (i32, i32) {
    %c0_i32 = arith.constant 0 : i32
    %c0_i32_0 = arith.constant 0 : i32
    %c0_i32_1 = arith.constant 0 : i32
    return %c0_i32, %c0_i32_0 : i32, i32
  }
  func.func @transform_3(%arg0: i32) -> (i32, i32) {
    %c0_i32 = arith.constant 0 : i32
    %c0_i32_0 = arith.constant 0 : i32
    %c0_i32_1 = arith.constant 0 : i32
    return %c0_i32, %c0_i32_0 : i32, i32
  }
  func.func @transform_4(%arg0: i32) -> (i32, i32) {
    %c0_i32 = arith.constant 0 : i32
    %c0_i32_0 = arith.constant 0 : i32
    %c0_i32_1 = arith.constant 0 : i32
    return %c0_i32, %c0_i32_0 : i32, i32
  }
  func.func @transform_5(%arg0: i32) -> (i32, i32) {
    %c0_i32 = arith.constant 0 : i32
    %c0_i32_0 = arith.constant 0 : i32
    %c0_i32_1 = arith.constant 0 : i32
    return %c0_i32, %c0_i32_0 : i32, i32
  }
  func.func @transform_6(%arg0: i32) -> (i32, i32) {
    %c0_i32 = arith.constant 0 : i32
    %c0_i32_0 = arith.constant 0 : i32
    %c0_i32_1 = arith.constant 0 : i32
    return %c0_i32, %c0_i32_0 : i32, i32
  }
  func.func @transform_7(%arg0: i32) -> (i32, i32) {
    %c0_i32 = arith.constant 0 : i32
    %c0_i32_0 = arith.constant 0 : i32
    return %arg0, %c0_i32 : i32, i32
  }
  func.func @transform_8(%arg0: i32) -> (i32, i32) {
    %c0_i32 = arith.constant 0 : i32
    %c0_i32_0 = arith.constant 0 : i32
    return %arg0, %c0_i32 : i32, i32
  }
}

</mosaic_0001>

<llo_original>
// kernel: tpu_custom_call.1
$region0: #{tpu_custom_call.1}
  #allocation0 [shape = 'u32[]', space=smem, size = 0x4, offset = 0x4, fixed_abs, tag = 'smem constant byte address 0x4 - core index']
  #allocation1 [shape = 'u32[144,128]{1,0:T(1,128)}', space=vmem, size = 0x12000, scoped, tag = 'internal scratch']
  %s0 = inlined_call_operand.vmem [shape: f32[64,32], index: 0, kind: input, shape index: {}]
  %s1 = inlined_call_operand.vmem [shape: f32[32,64], index: 1, kind: input, shape index: {}]
  %s2 = inlined_call_operand.vmem [shape: f32[64,256], index: 2, kind: input, shape index: {}]
  %s3 = inlined_call_operand.vmem [shape: f32[3,256], index: 3, kind: input, shape index: {}]
  %s4 = inlined_call_operand.hbm [shape: bf16[256,384], index: 4, kind: input, shape index: {}]
  %s5 = inlined_call_operand.vmem [shape: bf16[128,16], index: 5, kind: input, shape index: {}]
  %s6 = inlined_call_operand.hbm [shape: bf16[128,256], index: 6, kind: input, shape index: {}]
  %s7 = inlined_call_operand.hbm [shape: f32[64,128], index: 7, kind: output, shape index: {0}]
  %s8 = inlined_call_operand.hbm [shape: f32[512,128], index: 8, kind: output, shape index: {1}]
  %9 = xla_tuple %s7, %s8
  %s10 = sld [smem:[#allocation0]]
  $region77: #{tpu_custom_call.1} parent=0
    _
  %s12 = ssub.s32 1, %s10
  %s13 = scalar_select 0, %s12, %s10
  $region1: #{tpu_custom_call.1} parent=0
    #allocation2 [shape = 'u8[196608]{0}', space=vmem, size = 0x30000, scoped, tag = 'input window, operand 4, single buffered']
    #allocation3 [shape = 's32[2]{0}', space=sflag, size = 0x8, scoped, tag = 'scoped memory for tpu_custom_call.1']
    #allocation4 [shape = 's32[2]{0}', space=sflag, size = 0x8, scoped, tag = 'scoped memory for tpu_custom_call.1']
    #allocation5 [shape = 'u8[65536]{0}', space=vmem, size = 0x10000, scoped, tag = 'input window, operand 6, single buffered']
    #allocation6 [shape = 's32[1]{0}', space=sflag, size = 0x4, scoped, tag = 'scoped memory for tpu_custom_call.1']
    #allocation7 [shape = 'u8[16384]{0}', space=vmem, size = 0x4000, scoped, tag = 'output window, operand 0']
    #allocation8 [shape = 'u8[131072]{0}', space=vmem, size = 0x20000, scoped, tag = 'output window, operand 1']
    #allocation9 [shape = 's32[2]{0}', space=sflag, size = 0x8, scoped, tag = 'scoped memory for tpu_custom_call.1']
    %14 = vsyncpa [#allocation3], 0
    %15 = vsyncpa [#allocation6], 0
    %16 = vsyncpa [#allocation4], 0
    %s17 = scalar_lea.sflag [#allocation4], 1
    %18 = vsyncpa %s17, 0
    %19 = vsyncpa [#allocation9], 0
    %s20 = scalar_lea.sflag [#allocation9], 1
    %21 = vsyncpa %s20, 0
    loop: start=0, step=1, limit=6
    $region2: #{tpu_custom_call.1} parent=1 // loop_pre_header
      _
    $region3: #{tpu_custom_call.1} parent=1 // loop_header
      %s23 = sphi 0, %s27
      %p24 = scmp.ge.s32.totalorder %s23, 6
      %s33 = sphi 0, %s35
      %s36 = sphi 0, %s33
      %s37 = sphi 0, %s36
      %s53 = sphi 0, %s37
      %s57 = sphi 0, %s57
      %s59 = sphi 0, %s57
      %s60 = sphi 0, %s59
      %s74 = sphi 0, %s60
      %s78 = sphi 0, %s78
      %s80 = sphi 0, %s78
      %s81 = sphi 0, %s80
      %s95 = sphi 0, %s81
      %s99 = sphi 0, %s99
      %s101 = sphi 0, %s99
      %s102 = sphi 0, %s101
      %s116 = sphi 0, %s102
      %s120 = sphi 0, %s120
      %s122 = sphi 0, %s120
      %s123 = sphi 0, %s122
      %s137 = sphi 0, %s123
      %s141 = sphi 0, %s141
      %s143 = sphi 0, %s141
      %s144 = sphi 0, %s143
      %s158 = sphi 0, %s144
      %s162 = sphi 0, %s162
      %s164 = sphi 0, %s162
      %s165 = sphi 0, %s164
      %s179 = sphi 0, %s165
      %s185 = sphi 0, %s187
      %s188 = sphi 0, %s185
      %s189 = sphi 0, %s188
      %s205 = sphi 0, %s189
      %s211 = sphi 0, %s213
      %s214 = sphi 0, %s211
      %s215 = sphi 0, %s214
      %s231 = sphi 0, %s215
    $region4: #{tpu_custom_call.1} parent=1 // loop_header_branch
      %26 = sbr.rel (%p24) target = $region8
    $region5: #{tpu_custom_call.1} parent=1 // loop_body
      %s28 = ssub.s32 %s23, 1
      %s29 = ssub.s32 %s23, 2
      %s30 = sadd.s32 %s23, 1
      %s31 = ssub.s32 %s23, %s30
      %p32 = scmp.eq.s32.totalorder %s31, 0
      %s34 = sadd.s32 %s33, 1
      %s35 = scalar_select %p32, %s33, %s34
      %p38 = pneg %p32
      %p39 = scmp.eq.s32.totalorder %s23, 3
      %p40 = por %p38, %p39
      %p41 = scmp.ne.s32.totalorder %s33, %s36
      %p42 = scmp.eq.s32.totalorder %s23, 0
      %p43 = por %p41, %p42
      %p44 = scmp.ne.s32.totalorder %s33, %s36
      %p45 = scmp.eq.s32.totalorder %s28, 3
      %p46 = por %p44, %p45
      %p47 = scmp.ne.s32.totalorder %s36, %s37
      %p48 = scmp.eq.s32.totalorder %s28, 0
      %p49 = por %p47, %p48
      %p50 = scmp.ne.s32.totalorder %s36, %s37
      %p51 = scmp.eq.s32.totalorder %s29, 3
      %p52 = por %p50, %p51
      %p54 = scmp.ne.s32.totalorder %s37, %s53
      %p55 = scmp.eq.s32.totalorder %s29, 0
      %p56 = por %p54, %p55
      %s58 = sadd.s32 %s57, 1
      %p61 = scmp.eq.s32.totalorder %s23, 3
      %p62 = scmp.ne.s32.totalorder %s57, %s59
      %p63 = scmp.eq.s32.totalorder %s23, 0
      %p64 = por %p62, %p63
      %p65 = scmp.ne.s32.totalorder %s57, %s59
      %p66 = scmp.eq.s32.totalorder %s28, 3
      %p67 = por %p65, %p66
      %p68 = scmp.ne.s32.totalorder %s59, %s60
      %p69 = scmp.eq.s32.totalorder %s28, 0
      %p70 = por %p68, %p69
      %p71 = scmp.ne.s32.totalorder %s59, %s60
      %p72 = scmp.eq.s32.totalorder %s29, 3
      %p73 = por %p71, %p72
      %p75 = scmp.ne.s32.totalorder %s60, %s74
      %p76 = scmp.eq.s32.totalorder %s29, 0
      %p77 = por %p75, %p76
      %s79 = sadd.s32 %s78, 1
      %p82 = scmp.eq.s32.totalorder %s23, 3
      %p83 = scmp.ne.s32.totalorder %s78, %s80
      %p84 = scmp.eq.s32.totalorder %s23, 0
      %p85 = por %p83, %p84
      %p86 = scmp.ne.s32.totalorder %s78, %s80
      %p87 = scmp.eq.s32.totalorder %s28, 3
      %p88 = por %p86, %p87
      %p89 = scmp.ne.s32.totalorder %s80, %s81
      %p90 = scmp.eq.s32.totalorder %s28, 0
      %p91 = por %p89, %p90
      %p92 = scmp.ne.s32.totalorder %s80, %s81
      %p93 = scmp.eq.s32.totalorder %s29, 3
      %p94 = por %p92, %p93
      %p96 = scmp.ne.s32.totalorder %s81, %s95
      %p97 = scmp.eq.s32.totalorder %s29, 0
      %p98 = por %p96, %p97
      %s100 = sadd.s32 %s99, 1
      %p103 = scmp.eq.s32.totalorder %s23, 3
      %p104 = scmp.ne.s32.totalorder %s99, %s101
      %p105 = scmp.eq.s32.totalorder %s23, 0
      %p106 = por %p104, %p105
      %p107 = scmp.ne.s32.totalorder %s99, %s101
      %p108 = scmp.eq.s32.totalorder %s28, 3
      %p109 = por %p107, %p108
      %p110 = scmp.ne.s32.totalorder %s101, %s102
      %p111 = scmp.eq.s32.totalorder %s28, 0
      %p112 = por %p110, %p111
      %p113 = scmp.ne.s32.totalorder %s101, %s102
      %p114 = scmp.eq.s32.totalorder %s29, 3
      %p115 = por %p113, %p114
      %p117 = scmp.ne.s32.totalorder %s102, %s116
      %p118 = scmp.eq.s32.totalorder %s29, 0
      %p119 = por %p117, %p118
      %s121 = sadd.s32 %s120, 1
      %p124 = scmp.eq.s32.totalorder %s23, 3
      %p125 = scmp.ne.s32.totalorder %s120, %s122
      %p126 = scmp.eq.s32.totalorder %s23, 0
      %p127 = por %p125, %p126
      %p128 = scmp.ne.s32.totalorder %s120, %s122
      %p129 = scmp.eq.s32.totalorder %s28, 3
      %p130 = por %p128, %p129
      %p131 = scmp.ne.s32.totalorder %s122, %s123
      %p132 = scmp.eq.s32.totalorder %s28, 0
      %p133 = por %p131, %p132
      %p134 = scmp.ne.s32.totalorder %s122, %s123
      %p135 = scmp.eq.s32.totalorder %s29, 3
      %p136 = por %p134, %p135
      %p138 = scmp.ne.s32.totalorder %s123, %s137
      %p139 = scmp.eq.s32.totalorder %s29, 0
      %p140 = por %p138, %p139
      %s142 = sadd.s32 %s141, 1
      %p145 = scmp.eq.s32.totalorder %s23, 3
      %p146 = scmp.ne.s32.totalorder %s141, %s143
      %p147 = scmp.eq.s32.totalorder %s23, 0
      %p148 = por %p146, %p147
      %p149 = scmp.ne.s32.totalorder %s141, %s143
      %p150 = scmp.eq.s32.totalorder %s28, 3
      %p151 = por %p149, %p150
      %p152 = scmp.ne.s32.totalorder %s143, %s144
      %p153 = scmp.eq.s32.totalorder %s28, 0
      %p154 = por %p152, %p153
      %p155 = scmp.ne.s32.totalorder %s143, %s144
      %p156 = scmp.eq.s32.totalorder %s29, 3
      %p157 = por %p155, %p156
      %p159 = scmp.ne.s32.totalorder %s144, %s158
      %p160 = scmp.eq.s32.totalorder %s29, 0
      %p161 = por %p159, %p160
      %s163 = sadd.s32 %s162, 1
      %p166 = scmp.eq.s32.totalorder %s23, 3
      %p167 = scmp.ne.s32.totalorder %s162, %s164
      %p168 = scmp.eq.s32.totalorder %s23, 0
      %p169 = por %p167, %p168
      %p170 = scmp.ne.s32.totalorder %s162, %s164
      %p171 = scmp.eq.s32.totalorder %s28, 3
      %p172 = por %p170, %p171
      %p173 = scmp.ne.s32.totalorder %s164, %s165
      %p174 = scmp.eq.s32.totalorder %s28, 0
      %p175 = por %p173, %p174
      %p176 = scmp.ne.s32.totalorder %s164, %s165
      %p177 = scmp.eq.s32.totalorder %s29, 3
      %p178 = por %p176, %p177
      %p180 = scmp.ne.s32.totalorder %s165, %s179
      %p181 = scmp.eq.s32.totalorder %s29, 0
      %p182 = por %p180, %p181
      %s183 = ssub.s32 %s23, %s30
      %p184 = scmp.eq.s32.totalorder %s183, 0
      %s186 = sadd.s32 %s185, 1
      %s187 = scalar_select %p184, %s185, %s186
      %p190 = pneg %p184
      %p191 = scmp.eq.s32.totalorder %s23, 3
      %p192 = por %p190, %p191
      %p193 = scmp.ne.s32.totalorder %s185, %s188
      %p194 = scmp.eq.s32.totalorder %s23, 0
      %p195 = por %p193, %p194
      %p196 = scmp.ne.s32.totalorder %s185, %s188
      %p197 = scmp.eq.s32.totalorder %s28, 3
      %p198 = por %p196, %p197
      %p199 = scmp.ne.s32.totalorder %s188, %s189
      %p200 = scmp.eq.s32.totalorder %s28, 0
      %p201 = por %p199, %p200
      %p202 = scmp.ne.s32.totalorder %s188, %s189
      %p203 = scmp.eq.s32.totalorder %s29, 3
      %p204 = por %p202, %p203
      %p206 = scmp.ne.s32.totalorder %s189, %s205
      %p207 = scmp.eq.s32.totalorder %s29, 0
      %p208 = por %p206, %p207
      %s209 = ssub.s32 %s23, %s30
      %p210 = scmp.eq.s32.totalorder %s209, 0
      %s212 = sadd.s32 %s211, 1
      %s213 = scalar_select %p210, %s211, %s212
      %p216 = pneg %p210
      %p217 = scmp.eq.s32.totalorder %s23, 3
      %p218 = por %p216, %p217
      %p219 = scmp.ne.s32.totalorder %s211, %s214
      %p220 = scmp.eq.s32.totalorder %s23, 0
      %p221 = por %p219, %p220
      %p222 = scmp.ne.s32.totalorder %s211, %s214
      %p223 = scmp.eq.s32.totalorder %s28, 3
      %p224 = por %p222, %p223
      %p225 = scmp.ne.s32.totalorder %s214, %s215
      %p226 = scmp.eq.s32.totalorder %s28, 0
      %p227 = por %p225, %p226
      %p228 = scmp.ne.s32.totalorder %s214, %s215
      %p229 = scmp.eq.s32.totalorder %s29, 3
      %p230 = por %p228, %p229
      %p232 = scmp.ne.s32.totalorder %s215, %s231
      %p233 = scmp.eq.s32.totalorder %s29, 0
      %p234 = por %p232, %p233
      %p235 = scmp.le.s32.totalorder 1, %s23
      %p236 = scmp.lt.s32.totalorder %s23, 5
      %p237 = pnand %p235, %p236
      %p238 = pneg %p237
      // Predicated region
      $region9: #{tpu_custom_call.1} parent=5 // pred_check
        _
      $region10: #{tpu_custom_call.1} parent=5 // pred_check_branch
        %240 = sbr.rel (%p237) target = $region12
      $region11: #{tpu_custom_call.1} parent=5 // pred_region
        %s241 = ssub.s32 %s23, 1
        // Predicated region
        $region13: #{tpu_custom_call.1} parent=11 // pred_check
          %p242 = pneg %p70
        $region14: #{tpu_custom_call.1} parent=11 // pred_check_branch
          %244 = sbr.rel (%p242) target = $region16
        $region15: #{tpu_custom_call.1} parent=11 // pred_region
          _
        $region16: #{tpu_custom_call.1} parent=11 // pred_fallthru
          _
        // Predicated region
        $region17: #{tpu_custom_call.1} parent=11 // pred_check
          %p245 = pneg %p91
        $region18: #{tpu_custom_call.1} parent=11 // pred_check_branch
          %247 = sbr.rel (%p245) target = $region20
        $region19: #{tpu_custom_call.1} parent=11 // pred_region
          _
        $region20: #{tpu_custom_call.1} parent=11 // pred_fallthru
          _
        // Predicated region
        $region21: #{tpu_custom_call.1} parent=11 // pred_check
          %p248 = pneg %p112
        $region22: #{tpu_custom_call.1} parent=11 // pred_check_branch
          %250 = sbr.rel (%p248) target = $region24
        $region23: #{tpu_custom_call.1} parent=11 // pred_region
          _
        $region24: #{tpu_custom_call.1} parent=11 // pred_fallthru
          _
        // Predicated region
        $region25: #{tpu_custom_call.1} parent=11 // pred_check
          %p251 = pneg %p133
        $region26: #{tpu_custom_call.1} parent=11 // pred_check_branch
          %253 = sbr.rel (%p251) target = $region28
        $region27: #{tpu_custom_call.1} parent=11 // pred_region
          %s255 = ssub.s32 6144, 6144
          %256 = vsyncadd [#allocation3], %s255
          %s257 = sshll.u32 [#allocation2], 4
          %s258 = int_to_ptr.vmem [resolvable:$true] %s257
          %263 = dma.hbm_to_vmem [thread:$0]  %s4, 6144, %s258, [#allocation3], 192, 192, 12
        $region28: #{tpu_custom_call.1} parent=11 // pred_fallthru
          _
        // Predicated region
        $region29: #{tpu_custom_call.1} parent=11 // pred_check
          %p264 = pneg %p154
        $region30: #{tpu_custom_call.1} parent=11 // pred_check_branch
          %266 = sbr.rel (%p264) target = $region32
        $region31: #{tpu_custom_call.1} parent=11 // pred_region
          _
        $region32: #{tpu_custom_call.1} parent=11 // pred_fallthru
          _
        // Predicated region
        $region33: #{tpu_custom_call.1} parent=11 // pred_check
          %p267 = pneg %p175
        $region34: #{tpu_custom_call.1} parent=11 // pred_check_branch
          %269 = sbr.rel (%p267) target = $region36
        $region35: #{tpu_custom_call.1} parent=11 // pred_region
          %s271 = ssub.s32 2048, 2048
          %272 = vsyncadd [#allocation6], %s271
          %s273 = sshll.u32 [#allocation5], 4
          %s274 = int_to_ptr.vmem [resolvable:$true] %s273
          %279 = dma.hbm_to_vmem [thread:$0]  %s6, 2048, %s274, [#allocation6], 128, 128, 8
        $region36: #{tpu_custom_call.1} parent=11 // pred_fallthru
          _
      $region12: #{tpu_custom_call.1} parent=5 // pred_fallthru
        _
      %p280 = scmp.lt.s32.totalorder %s23, 4
      // Predicated region
      $region37: #{tpu_custom_call.1} parent=5 // pred_check
        %p281 = pneg %p280
      $region38: #{tpu_custom_call.1} parent=5 // pred_check_branch
        %283 = sbr.rel (%p281) target = $region40
      $region39: #{tpu_custom_call.1} parent=5 // pred_region
        // Predicated region
        $region41: #{tpu_custom_call.1} parent=39 // pred_check
          %p284 = pneg %p43
        $region42: #{tpu_custom_call.1} parent=39 // pred_check_branch
          %286 = sbr.rel (%p284) target = $region44
        $region43: #{tpu_custom_call.1} parent=39 // pred_region
          %s287 = smul.u32 2, %s23
          %p288 = scmp.lt.s32.totalorder %s287, 7
          %s289 = scalar_select %p288, %s287, 7
          %s290 = smul.addr %s289, 8
          %s291 = scalar_lea.vmem %s0, %s290
          %s292 = smul.u32 2, %s23
        $region44: #{tpu_custom_call.1} parent=39 // pred_fallthru
          _
      $region40: #{tpu_custom_call.1} parent=5 // pred_fallthru
        _
      %p293 = scmp.le.s32.totalorder 1, %s23
      %p294 = scmp.lt.s32.totalorder %s23, 5
      %p295 = pnand %p293, %p294
      %p296 = pneg %p295
      // Predicated region
      $region45: #{tpu_custom_call.1} parent=5 // pred_check
        _
      $region46: #{tpu_custom_call.1} parent=5 // pred_check_branch
        %298 = sbr.rel (%p295) target = $region48
      $region47: #{tpu_custom_call.1} parent=5 // pred_region
        %s299 = ssub.s32 %s23, 1
        // Predicated region
        $region49: #{tpu_custom_call.1} parent=47 // pred_check
          %p300 = pneg %p133
        $region50: #{tpu_custom_call.1} parent=47 // pred_check_branch
          %302 = sbr.rel (%p300) target = $region52
        $region51: #{tpu_custom_call.1} parent=47 // pred_region
          %303 = dma.done [#allocation3], 6144
        $region52: #{tpu_custom_call.1} parent=47 // pred_fallthru
          _
        // Predicated region
        $region53: #{tpu_custom_call.1} parent=47 // pred_check
          %p304 = pneg %p175
        $region54: #{tpu_custom_call.1} parent=47 // pred_check_branch
          %306 = sbr.rel (%p304) target = $region56
        $region55: #{tpu_custom_call.1} parent=47 // pred_region
          %307 = dma.done [#allocation6], 2048
        $region56: #{tpu_custom_call.1} parent=47 // pred_fallthru
          _
        %s308 = smul.u32 2, %s28
        %p309 = scmp.lt.s32.totalorder %s308, 7
        %s310 = scalar_select %p309, %s308, 7
        %s311 = smul.addr %s310, 8
        %s312 = scalar_lea.vmem %s0, %s311
        %p313 = pneg %p49
        %p314 = pneg %p46
        %p315 = pneg %p70
        %p316 = pneg %p67
        %p317 = pneg %p91
        %p318 = pneg %p88
        %p319 = pneg %p112
        %p320 = pneg %p109
        %p321 = pneg %p133
        %p322 = pneg %p130
        %p323 = pneg %p154
        %p324 = pneg %p151
        %p325 = pneg %p175
        %p326 = pneg %p172
        %p327 = pneg %p201
        %p328 = pneg %p198
        %s329 = sand.u32 %s188, 1
        %s330 = scalar_lea.sflag [#allocation4], %s329
        %s331 = sand.u32 %s188, 1
        %s332 = smul.addr %s331, 16
        %s333 = scalar_lea.vmem [#allocation7], %s332
        %p334 = pneg %p227
        %p335 = pneg %p224
        %s336 = sand.u32 %s214, 1
        %s337 = scalar_lea.sflag [#allocation9], %s336
        %s338 = sand.u32 %s214, 1
        %s339 = smul.addr %s338, 128
        %s340 = scalar_lea.vmem [#allocation8], %s339
        %s341 = smul.u32 2, %s28
        %p342 = scmp.lt.s32.totalorder %s341, 7
        %s343 = scalar_select %p342, %s341, 7
        %s344 = smul.addr %s343, 8
        %s345 = scalar_lea.vmem %s0, %s344
        %s346 = smul.u32 2, %s28
        %s347 = smul.u32 2, %s28
        %s348 = smul.u32 16, %s28
        %v350 = vld [vmem:[%s3] ss:$4 sm:$0x3]
        %s351 = scalar_lea.vmem %s3, 1
        %v352 = vld [vmem:[%s351] ss:$4 sm:$0x3]
        %v353 = vld [vmem:[%s3 + $0x2] sm:$0x1]
        %v354 = vld [vmem:[%s345] sm:$0xff]
        %v355 = vld [vmem:[%s345 + $0x8] sm:$0xff]
        %v356 = vld [vmem:[%s1] sm:$0xff]
        %v357 = vld [vmem:[%s1 + $0x8] sm:$0xff]
        %v358 = vld [vmem:[%s1 + $0x10] sm:$0xff]
        %v359 = vld [vmem:[%s1 + $0x18] sm:$0xff]
        %v360 = vlaneseq
        %v361 = vshrl.u32 %v360, 7
        %v362 = vsub.s32 0, %v361
        %v363 = vrot.slane %v353, %v362
        %vm364 = vcmask 261120
        %v366 = vsel %vm364, %v354, 0
        %v369 = vsel %vm364, %v355, 0
        %371 = vmatprep.subr.mxu0 0.0
        %372 = vmatpush1.msra.mxu0 %v356
        %373 = vmatprep.subr.mxu0 0.0
        %374 = vmatpush1.msra.mxu0 %v357
        %375 = vmatprep.subr.mxu0 0.0
        %376 = vmatpush1.msra.mxu0 %v358
        %377 = vmatprep.subr.mxu0 0.0
        %378 = vmatpush1.msra.mxu0 %v359
        %379 = vmatprep.subr.mxu0 0.0
        %380 = vmatpush1.msra.mxu0 0.0
        %381 = vmatprep.subr.mxu0 0.0
        %382 = vmatpush1.msra.mxu0 0.0
        %383 = vmatprep.subr.mxu0 0.0
        %384 = vmatpush1.msra.mxu0 0.0
        %385 = vmatprep.subr.mxu0 0.0
        %386 = vmatpush1.msra.mxu0 0.0
        %387 = vmatprep.subr.mxu0 0.0
        %388 = vmatpush1.msra.mxu0 0.0
        %389 = vmatprep.subr.mxu0 0.0
        %390 = vmatpush1.msra.mxu0 0.0
        %391 = vmatprep.subr.mxu0 0.0
        %392 = vmatpush1.msra.mxu0 0.0
        %393 = vmatprep.subr.mxu0 0.0
        %394 = vmatpush1.msra.mxu0 0.0
        %395 = vmatprep.subr.mxu0 0.0
        %396 = vmatpush1.msra.mxu0 0.0
        %397 = vmatprep.subr.mxu0 0.0
        %398 = vmatpush1.msra.mxu0 0.0
        %399 = vmatprep.subr.mxu0 0.0
        %400 = vmatpush1.msra.mxu0 0.0
        %401 = vmatprep.subr.mxu0 0.0
        %402 = vmatpush1.msra.mxu0 0.0
        %403 = vmatprep.subr.mxu0 0.0
        %404 = vmatpush1.msra.mxu0 0.0
        %405 = vmatprep.subr.mxu0 0.0
        %406 = vmatpush1.msra.mxu0 0.0
        %407 = vmatprep.subr.mxu0 0.0
        %408 = vmatpush1.msra.mxu0 0.0
        %409 = vmatprep.subr.mxu0 0.0
        %410 = vmatpush1.msra.mxu0 0.0
        %411 = vmatprep.subr.mxu0 0.0
        %412 = vmatpush1.msra.mxu0 0.0
        %413 = vmatprep.subr.mxu0 0.0
        %414 = vmatpush1.msra.mxu0 0.0
        %415 = vmatprep.subr.mxu0 0.0
        %416 = vmatpush1.msra.mxu0 0.0
        %417 = vmatprep.subr.mxu0 0.0
        %418 = vmatpush1.msra.mxu0 0.0
        %419 = vmatprep.subr.mxu0 0.0
        %420 = vmatpush1.msra.mxu0 0.0
        %421 = vmatprep.subr.mxu0 0.0
        %422 = vmatpush1.msra.mxu0 0.0
        %423 = vmatprep.subr.mxu0 0.0
        %424 = vmatpush1.msra.mxu0 0.0
        %425 = vmatprep.subr.mxu0 0.0
        %426 = vmatpush1.msra.mxu0 0.0
        %427 = vmatprep.subr.mxu0 0.0
        %428 = vmatpush1.msra.mxu0 0.0
        %429 = vmatprep.subr.mxu0 0.0
        %430 = vmatpush1.msra.mxu0 0.0
        %431 = vmatprep.subr.mxu0 0.0
        %432 = vmatpush1.msra.mxu0 0.0
        %433 = vmatprep.subr.mxu0 0.0
        %434 = vmatpush1.msra.mxu0 0.0
        %435 = vmatprep.mubr.f32.mxu0 0.0
        %436 = vmatmul.mubr.f32.gmra.mrb[0].mxu0 %v366
        %v437 = vpop.f32.mrb[0].mxu0
        %v438 = vadd.f32 %v363, %v437
        %v439 = vpop.f32.mrb[0].mxu0
        %440 = vmatprep.mubr.f32.mxu0 0.0
        %441 = vmatmul.mubr.f32.gmra.mrb[0].mxu0 %v369
        %v442 = vpop.f32.mrb[0].mxu0
        %v443 = vadd.f32 %v363, %v442
        %v444 = vpop.f32.mrb[0].mxu0
        %445 = vdwg.mxu0
        %v446 = vmax.f32 %v438, 0.0
        %v447 = vmax.f32 %v443, 0.0
        %v448 = vld [vmem:[%s2] sm:$0xff]
        %v449 = vld [vmem:[%s2 + $0x8] sm:$0xff]
        %v450 = vld [vmem:[%s2 + $0x10] sm:$0xff]
        %v451 = vld [vmem:[%s2 + $0x18] sm:$0xff]
        %v452 = vld [vmem:[%s2 + $0x20] sm:$0xff]
        %v453 = vld [vmem:[%s2 + $0x28] sm:$0xff]
        %v454 = vld [vmem:[%s2 + $0x30] sm:$0xff]
        %v455 = vld [vmem:[%s2 + $0x38] sm:$0xff]
        %v456 = vld [vmem:[%s2 + $0x40] sm:$0xff]
        %v457 = vld [vmem:[%s2 + $0x48] sm:$0xff]
        %v458 = vld [vmem:[%s2 + $0x50] sm:$0xff]
        %v459 = vld [vmem:[%s2 + $0x58] sm:$0xff]
        %v460 = vld [vmem:[%s2 + $0x60] sm:$0xff]
        %v461 = vld [vmem:[%s2 + $0x68] sm:$0xff]
        %v462 = vld [vmem:[%s2 + $0x70] sm:$0xff]
        %v463 = vld [vmem:[%s2 + $0x78] sm:$0xff]
        %v465 = vlaneseq
        %v466 = vshrl.u32 %v465, 7
        %v467 = vsub.s32 0, %v466
        %v468 = vrot.slane %v352, %v467
        %v469 = vlaneseq
        %v470 = vshrl.u32 %v469, 7
        %v471 = vsub.s32 1, %v470
        %v472 = vrot.slane %v352, %v471
        %vm475 = vcmask 523264
        %v477 = vsel %vm475, %v446, 0
        %v480 = vsel %vm475, %v447, 0
        %482 = vmatprep.subr.mxu0 %v449
        %483 = vmatpush1.msra.mxu0 %v448
        %484 = vmatprep.subr.mxu0 %v451
        %485 = vmatpush1.msra.mxu0 %v450
        %486 = vmatprep.subr.mxu0 %v453
        %487 = vmatpush1.msra.mxu0 %v452
        %488 = vmatprep.subr.mxu0 %v455
        %489 = vmatpush1.msra.mxu0 %v454
        %490 = vmatprep.subr.mxu0 %v457
        %491 = vmatpush1.msra.mxu0 %v456
        %492 = vmatprep.subr.mxu0 %v459
        %493 = vmatpush1.msra.mxu0 %v458
        %494 = vmatprep.subr.mxu0 %v461
        %495 = vmatpush1.msra.mxu0 %v460
        %496 = vmatprep.subr.mxu0 %v463
        %497 = vmatpush1.msra.mxu0 %v462
        %498 = vmatprep.subr.mxu0 0.0
        %499 = vmatpush1.msra.mxu0 0.0
        %500 = vmatprep.subr.mxu0 0.0
        %501 = vmatpush1.msra.mxu0 0.0
        %502 = vmatprep.subr.mxu0 0.0
        %503 = vmatpush1.msra.mxu0 0.0
        %504 = vmatprep.subr.mxu0 0.0
        %505 = vmatpush1.msra.mxu0 0.0
        %506 = vmatprep.subr.mxu0 0.0
        %507 = vmatpush1.msra.mxu0 0.0
        %508 = vmatprep.subr.mxu0 0.0
        %509 = vmatpush1.msra.mxu0 0.0
        %510 = vmatprep.subr.mxu0 0.0
        %511 = vmatpush1.msra.mxu0 0.0
        %512 = vmatprep.subr.mxu0 0.0
        %513 = vmatpush1.msra.mxu0 0.0
        %514 = vmatprep.subr.mxu0 0.0
        %515 = vmatpush1.msra.mxu0 0.0
        %516 = vmatprep.subr.mxu0 0.0
        %517 = vmatpush1.msra.mxu0 0.0
        %518 = vmatprep.subr.mxu0 0.0
        %519 = vmatpush1.msra.mxu0 0.0
        %520 = vmatprep.subr.mxu0 0.0
        %521 = vmatpush1.msra.mxu0 0.0
        %522 = vmatprep.subr.mxu0 0.0
        %523 = vmatpush1.msra.mxu0 0.0
        %524 = vmatprep.subr.mxu0 0.0
        %525 = vmatpush1.msra.mxu0 0.0
        %526 = vmatprep.subr.mxu0 0.0
        %527 = vmatpush1.msra.mxu0 0.0
        %528 = vmatprep.subr.mxu0 0.0
        %529 = vmatpush1.msra.mxu0 0.0
        %530 = vmatprep.subr.mxu0 0.0
        %531 = vmatpush1.msra.mxu0 0.0
        %532 = vmatprep.subr.mxu0 0.0
        %533 = vmatpush1.msra.mxu0 0.0
        %534 = vmatprep.subr.mxu0 0.0
        %535 = vmatpush1.msra.mxu0 0.0
        %536 = vmatprep.subr.mxu0 0.0
        %537 = vmatpush1.msra.mxu0 0.0
        %538 = vmatprep.subr.mxu0 0.0
        %539 = vmatpush1.msra.mxu0 0.0
        %540 = vmatprep.subr.mxu0 0.0
        %541 = vmatpush1.msra.mxu0 0.0
        %542 = vmatprep.subr.mxu0 0.0
        %543 = vmatpush1.msra.mxu0 0.0
        %544 = vmatprep.subr.mxu0 0.0
        %545 = vmatpush1.msra.mxu0 0.0
        %546 = vmatprep.mubr.f32.mxu0 0.0
        %547 = vmatmul.mubr.f32.gmra.mrb[0].mxu0 %v477
        %v548 = vpop.f32.mrb[0].mxu0
        %v549 = vadd.f32 %v468, %v548
        %v550 = vpop.f32.mrb[0].mxu0
        %v551 = vadd.f32 %v472, %v550
        %552 = vmatprep.mubr.f32.mxu0 0.0
        %553 = vmatmul.mubr.f32.gmra.mrb[0].mxu0 %v480
        %v554 = vpop.f32.mrb[0].mxu0
        %v555 = vadd.f32 %v468, %v554
        %v556 = vpop.f32.mrb[0].mxu0
        %v557 = vadd.f32 %v472, %v556
        %558 = vdwg.mxu0
        %v559 = vmin.f32 %v549, %v551
        %v560 = vmin.f32 %v555, %v557
        %v561 = vmin.f32 %v559, %v560
        %562 = vmin.xlane.f32.xlu0 %v561
        %v563 = vpop.xlane.xlu0 %562
        %v564 = vrot.slane %v563, 4
        %v565 = vmin.f32 %v563, %v564
        %v566 = vrot.slane %v565, 2
        %v567 = vmin.f32 %v565, %v566
        %v568 = vrot.slane %v567, 1
        %v569 = vmin.f32 %v567, %v568
        %s570 = vtos %v569
        %v571 = vstv %s570
        %v572 = vmax.f32 %v549, %v551
        %v573 = vmax.f32 %v555, %v557
        %v574 = vmax.f32 %v572, %v573
        %575 = vmax.xlane.f32.xlu0 %v574
        %v576 = vpop.xlane.xlu0 %575
        %v577 = vrot.slane %v576, 4
        %v578 = vmax.f32 %v576, %v577
        %v579 = vrot.slane %v578, 2
        %v580 = vmax.f32 %v578, %v579
        %v581 = vrot.slane %v580, 1
        %v582 = vmax.f32 %v580, %v581
        %s583 = vtos %v582
        %v584 = vstv %s583
        %v585 = vsub.f32 %v549, %v571
        %v586 = vsub.f32 %v551, %v571
        %v587 = vsub.f32 %v555, %v571
        %v588 = vsub.f32 %v557, %v571
        %v589 = vsub.f32 %v584, %v571
        %v590 = vrcp.pop %v589
        %v591 = vmul.f32 190.0, %v590
        %v592 = vmul.f32 %v585, %v591
        %v593 = vmul.f32 %v586, %v591
        %v594 = vmul.f32 %v587, %v591
        %v595 = vmul.f32 %v588, %v591
        %v596 = vadd.f32 %v592, -95.0
        %v597 = vadd.f32 %v593, -95.0
        %v598 = vadd.f32 %v594, -95.0
        %v599 = vadd.f32 %v595, -95.0
        %v601 = vlaneseq
        %v602 = vshrl.u32 %v601, 7
        %v603 = vsub.s32 0, %v602
        %v604 = vrot.slane %v350, %v603
        %v605 = vlaneseq
        %v606 = vshrl.u32 %v605, 7
        %v607 = vsub.s32 1, %v606
        %v608 = vrot.slane %v350, %v607
        %v611 = vsub.f32 %v596, %v604
        %v612 = vsub.f32 %v597, %v608
        %v613 = vsub.f32 %v598, %v604
        %v614 = vsub.f32 %v599, %v608
        %v615 = vand.u32 2147483647, %v611
        %v616 = vand.u32 2147483647, %v612
        %v617 = vand.u32 2147483647, %v613
        %v618 = vand.u32 2147483647, %v614
        %v619 = vmul.f32 %v615, 0.1453125
        %v620 = vmul.f32 %v616, 0.1453125
        %v621 = vmul.f32 %v617, 0.1453125
        %v622 = vmul.f32 %v618, 0.1453125
        %v623 = vmul.f32 %v619, 1.5
        %v624 = vmul.f32 %v620, 1.5
        %v625 = vmul.f32 %v621, 1.5
        %v626 = vmul.f32 %v622, 1.5
        %v627 = vsub.f32 %v623, 2.5
        %v628 = vsub.f32 %v624, 2.5
        %v629 = vsub.f32 %v625, 2.5
        %v630 = vsub.f32 %v626, 2.5
        %v631 = vmul.f32 %v627, %v619
        %v632 = vmul.f32 %v628, %v620
        %v633 = vmul.f32 %v629, %v621
        %v634 = vmul.f32 %v630, %v622
        %v635 = vmul.f32 %v631, %v619
        %v636 = vmul.f32 %v632, %v620
        %v637 = vmul.f32 %v633, %v621
        %v638 = vmul.f32 %v634, %v622
        %v639 = vadd.f32 %v635, 1.0
        %v640 = vadd.f32 %v636, 1.0
        %v641 = vadd.f32 %v637, 1.0
        %v642 = vadd.f32 %v638, 1.0
        %v643 = vmul.f32 %v619, -0.5
        %v644 = vmul.f32 %v620, -0.5
        %v645 = vmul.f32 %v621, -0.5
        %v646 = vmul.f32 %v622, -0.5
        %v647 = vadd.f32 %v643, 2.5
        %v648 = vadd.f32 %v644, 2.5
        %v649 = vadd.f32 %v645, 2.5
        %v650 = vadd.f32 %v646, 2.5
        %v651 = vmul.f32 %v647, %v619
        %v652 = vmul.f32 %v648, %v620
        %v653 = vmul.f32 %v649, %v621
        %v654 = vmul.f32 %v650, %v622
        %v655 = vsub.f32 %v651, 4.0
        %v656 = vsub.f32 %v652, 4.0
        %v657 = vsub.f32 %v653, 4.0
        %v658 = vsub.f32 %v654, 4.0
        %v659 = vmul.f32 %v655, %v619
        %v660 = vmul.f32 %v656, %v620
        %v661 = vmul.f32 %v657, %v621
        %v662 = vmul.f32 %v658, %v622
        %v663 = vadd.f32 %v659, 2.0
        %v664 = vadd.f32 %v660, 2.0
        %v665 = vadd.f32 %v661, 2.0
        %v666 = vadd.f32 %v662, 2.0
        %vm667 = vcmp.lt.f32.partialorder %v619, 1.0
        %vm668 = vcmp.lt.f32.partialorder %v620, 1.0
        %vm669 = vcmp.lt.f32.partialorder %v621, 1.0
        %vm670 = vcmp.lt.f32.partialorder %v622, 1.0
        %vm671 = vcmp.lt.f32.partialorder %v619, 2.0
        %vm672 = vcmp.lt.f32.partialorder %v620, 2.0
        %vm673 = vcmp.lt.f32.partialorder %v621, 2.0
        %vm674 = vcmp.lt.f32.partialorder %v622, 2.0
        %v675 = vsel %vm671, %v663, 0.0
        %v676 = vsel %vm672, %v664, 0.0
        %v677 = vsel %vm673, %v665, 0.0
        %v678 = vsel %vm674, %v666, 0.0
        %v679 = vsel %vm667, %v639, %v675
        %v680 = vsel %vm668, %v640, %v676
        %v681 = vsel %vm669, %v641, %v677
        %v682 = vsel %vm670, %v642, %v678
        %v683 = vpack.c.bf16 %v681, %v679
        %v684 = vpack.c.bf16 %v682, %v680
        %v685 = vld [vmem:[#allocation2] sm:$0xff]
        %v686 = vld [vmem:[#allocation2 + $0x8] sm:$0xf]
        %v687 = vld [vmem:[#allocation2 + $0xc] sm:$0xff]
        %v688 = vld [vmem:[#allocation2 + $0x14] sm:$0xf]
        %v689 = vld [vmem:[#allocation2 + $0x18] sm:$0xff]
        %v690 = vld [vmem:[#allocation2 + $0x20] sm:$0xf]
        %v691 = vld [vmem:[#allocation2 + $0x24] sm:$0xff]
        %v692 = vld [vmem:[#allocation2 + $0x2c] sm:$0xf]
        %v693 = vld [vmem:[#allocation2 + $0x30] sm:$0xff]
        %v694 = vld [vmem:[#allocation2 + $0x38] sm:$0xf]
        %v695 = vld [vmem:[#allocation2 + $0x3c] sm:$0xff]
        %v696 = vld [vmem:[#allocation2 + $0x44] sm:$0xf]
        %v697 = vld [vmem:[#allocation2 + $0x48] sm:$0xff]
        %v698 = vld [vmem:[#allocation2 + $0x50] sm:$0xf]
        %v699 = vld [vmem:[#allocation2 + $0x54] sm:$0xff]
        %v700 = vld [vmem:[#allocation2 + $0x5c] sm:$0xf]
        %v701 = vld [vmem:[#allocation2 + $0x60] sm:$0xff]
        %v702 = vld [vmem:[#allocation2 + $0x68] sm:$0xf]
        %v703 = vld [vmem:[#allocation2 + $0x6c] sm:$0xff]
        %v704 = vld [vmem:[#allocation2 + $0x74] sm:$0xf]
        %v705 = vld [vmem:[#allocation2 + $0x78] sm:$0xff]
        %v706 = vld [vmem:[#allocation2 + $0x80] sm:$0xf]
        %v707 = vld [vmem:[#allocation2 + $0x84] sm:$0xff]
        %v708 = vld [vmem:[#allocation2 + $0x8c] sm:$0xf]
        %v709 = vld [vmem:[#allocation2 + $0x90] sm:$0xff]
        %v710 = vld [vmem:[#allocation2 + $0x98] sm:$0xf]
        %v711 = vld [vmem:[#allocation2 + $0x9c] sm:$0xff]
        %v712 = vld [vmem:[#allocation2 + $0xa4] sm:$0xf]
        %v713 = vld [vmem:[#allocation2 + $0xa8] sm:$0xff]
        %v714 = vld [vmem:[#allocation2 + $0xb0] sm:$0xf]
        %v715 = vld [vmem:[#allocation2 + $0xb4] sm:$0xff]
        %v716 = vld [vmem:[#allocation2 + $0xbc] sm:$0xf]
        %v717 = vld [vmem:[#allocation2 + $0xc0] sm:$0xff]
        %v718 = vld [vmem:[#allocation2 + $0xc8] sm:$0xf]
        %v719 = vld [vmem:[#allocation2 + $0xcc] sm:$0xff]
        %v720 = vld [vmem:[#allocation2 + $0xd4] sm:$0xf]
        %v721 = vld [vmem:[#allocation2 + $0xd8] sm:$0xff]
        %v722 = vld [vmem:[#allocation2 + $0xe0] sm:$0xf]
        %v723 = vld [vmem:[#allocation2 + $0xe4] sm:$0xff]
        %v724 = vld [vmem:[#allocation2 + $0xec] sm:$0xf]
        %v725 = vld [vmem:[#allocation2 + $0xf0] sm:$0xff]
        %v726 = vld [vmem:[#allocation2 + $0xf8] sm:$0xf]
        %v727 = vld [vmem:[#allocation2 + $0xfc] sm:$0xff]
        %v728 = vld [vmem:[#allocation2 + $0x104] sm:$0xf]
        %v729 = vld [vmem:[#allocation2 + $0x108] sm:$0xff]
        %v730 = vld [vmem:[#allocation2 + $0x110] sm:$0xf]
        %v731 = vld [vmem:[#allocation2 + $0x114] sm:$0xff]
        %v732 = vld [vmem:[#allocation2 + $0x11c] sm:$0xf]
        %v733 = vld [vmem:[#allocation2 + $0x120] sm:$0xff]
        %v734 = vld [vmem:[#allocation2 + $0x128] sm:$0xf]
        %v735 = vld [vmem:[#allocation2 + $0x12c] sm:$0xff]
        %v736 = vld [vmem:[#allocation2 + $0x134] sm:$0xf]
        %v737 = vld [vmem:[#allocation2 + $0x138] sm:$0xff]
        %v738 = vld [vmem:[#allocation2 + $0x140] sm:$0xf]
        %v739 = vld [vmem:[#allocation2 + $0x144] sm:$0xff]
        %v740 = vld [vmem:[#allocation2 + $0x14c] sm:$0xf]
        %v741 = vld [vmem:[#allocation2 + $0x150] sm:$0xff]
        %v742 = vld [vmem:[#allocation2 + $0x158] sm:$0xf]
        %v743 = vld [vmem:[#allocation2 + $0x15c] sm:$0xff]
        %v744 = vld [vmem:[#allocation2 + $0x164] sm:$0xf]
        %v745 = vld [vmem:[#allocation2 + $0x168] sm:$0xff]
        %v746 = vld [vmem:[#allocation2 + $0x170] sm:$0xf]
        %v747 = vld [vmem:[#allocation2 + $0x174] sm:$0xff]
        %v748 = vld [vmem:[#allocation2 + $0x17c] sm:$0xf]
        %v813 = vunpack.c.l.b16 %v685
        %v814 = vunpack.c.h.b16 %v685
        %v815 = vunpack.c.l.b16 %v686
        %v816 = vunpack.c.l.b16 %v687
        %v817 = vunpack.c.h.b16 %v687
        %v818 = vunpack.c.l.b16 %v688
        %v819 = vunpack.c.l.b16 %v689
        %v820 = vunpack.c.h.b16 %v689
        %v821 = vunpack.c.l.b16 %v690
        %v822 = vunpack.c.l.b16 %v691
        %v823 = vunpack.c.h.b16 %v691
        %v824 = vunpack.c.l.b16 %v692
        %v825 = vunpack.c.l.b16 %v693
        %v826 = vunpack.c.h.b16 %v693
        %v827 = vunpack.c.l.b16 %v694
        %v828 = vunpack.c.l.b16 %v695
        %v829 = vunpack.c.h.b16 %v695
        %v830 = vunpack.c.l.b16 %v696
        %v831 = vunpack.c.l.b16 %v697
        %v832 = vunpack.c.h.b16 %v697
        %v833 = vunpack.c.l.b16 %v698
        %v834 = vunpack.c.l.b16 %v699
        %v835 = vunpack.c.h.b16 %v699
        %v836 = vunpack.c.l.b16 %v700
        %v837 = vunpack.c.l.b16 %v701
        %v838 = vunpack.c.h.b16 %v701
        %v839 = vunpack.c.l.b16 %v702
        %v840 = vunpack.c.l.b16 %v703
        %v841 = vunpack.c.h.b16 %v703
        %v842 = vunpack.c.l.b16 %v704
        %v843 = vunpack.c.l.b16 %v705
        %v844 = vunpack.c.h.b16 %v705
        %v845 = vunpack.c.l.b16 %v706
        %v846 = vunpack.c.l.b16 %v707
        %v847 = vunpack.c.h.b16 %v707
        %v848 = vunpack.c.l.b16 %v708
        %v849 = vunpack.c.l.b16 %v709
        %v850 = vunpack.c.h.b16 %v709
        %v851 = vunpack.c.l.b16 %v710
        %v852 = vunpack.c.l.b16 %v711
        %v853 = vunpack.c.h.b16 %v711
        %v854 = vunpack.c.l.b16 %v712
        %v855 = vunpack.c.l.b16 %v713
        %v856 = vunpack.c.h.b16 %v713
        %v857 = vunpack.c.l.b16 %v714
        %v858 = vunpack.c.l.b16 %v715
        %v859 = vunpack.c.h.b16 %v715
        %v860 = vunpack.c.l.b16 %v716
        %v861 = vunpack.c.l.b16 %v717
        %v862 = vunpack.c.h.b16 %v717
        %v863 = vunpack.c.l.b16 %v718
        %v864 = vunpack.c.l.b16 %v719
        %v865 = vunpack.c.h.b16 %v719
        %v866 = vunpack.c.l.b16 %v720
        %v867 = vunpack.c.l.b16 %v721
        %v868 = vunpack.c.h.b16 %v721
        %v869 = vunpack.c.l.b16 %v722
        %v870 = vunpack.c.l.b16 %v723
        %v871 = vunpack.c.h.b16 %v723
        %v872 = vunpack.c.l.b16 %v724
        %v873 = vunpack.c.l.b16 %v725
        %v874 = vunpack.c.h.b16 %v725
        %v875 = vunpack.c.l.b16 %v726
        %v876 = vunpack.c.l.b16 %v727
        %v877 = vunpack.c.h.b16 %v727
        %v878 = vunpack.c.l.b16 %v728
        %v879 = vunpack.c.l.b16 %v729
        %v880 = vunpack.c.h.b16 %v729
        %v881 = vunpack.c.l.b16 %v730
        %v882 = vunpack.c.l.b16 %v731
        %v883 = vunpack.c.h.b16 %v731
        %v884 = vunpack.c.l.b16 %v732
        %v885 = vunpack.c.l.b16 %v733
        %v886 = vunpack.c.h.b16 %v733
        %v887 = vunpack.c.l.b16 %v734
        %v888 = vunpack.c.l.b16 %v735
        %v889 = vunpack.c.h.b16 %v735
        %v890 = vunpack.c.l.b16 %v736
        %v891 = vunpack.c.l.b16 %v737
        %v892 = vunpack.c.h.b16 %v737
        %v893 = vunpack.c.l.b16 %v738
        %v894 = vunpack.c.l.b16 %v739
        %v895 = vunpack.c.h.b16 %v739
        %v896 = vunpack.c.l.b16 %v740
        %v897 = vunpack.c.l.b16 %v741
        %v898 = vunpack.c.h.b16 %v741
        %v899 = vunpack.c.l.b16 %v742
        %v900 = vunpack.c.l.b16 %v743
        %v901 = vunpack.c.h.b16 %v743
        %v902 = vunpack.c.l.b16 %v744
        %v903 = vunpack.c.l.b16 %v745
        %v904 = vunpack.c.h.b16 %v745
        %v905 = vunpack.c.l.b16 %v746
        %v906 = vunpack.c.l.b16 %v747
        %v907 = vunpack.c.h.b16 %v747
        %v908 = vunpack.c.l.b16 %v748
        %v909 = vpack.c.b16 %v816, %v813
        %v910 = vpack.c.b16 %v817, %v814
        %v911 = vpack.c.b16 %v818, %v815
        %v912 = vpack.c.b16 %v822, %v819
        %v913 = vpack.c.b16 %v823, %v820
        %v914 = vpack.c.b16 %v824, %v821
        %v915 = vpack.c.b16 %v828, %v825
        %v916 = vpack.c.b16 %v829, %v826
        %v917 = vpack.c.b16 %v830, %v827
        %v918 = vpack.c.b16 %v834, %v831
        %v919 = vpack.c.b16 %v835, %v832
        %v920 = vpack.c.b16 %v836, %v833
        %v921 = vpack.c.b16 %v840, %v837
        %v922 = vpack.c.b16 %v841, %v838
        %v923 = vpack.c.b16 %v842, %v839
        %v924 = vpack.c.b16 %v846, %v843
        %v925 = vpack.c.b16 %v847, %v844
        %v926 = vpack.c.b16 %v848, %v845
        %v927 = vpack.c.b16 %v852, %v849
        %v928 = vpack.c.b16 %v853, %v850
        %v929 = vpack.c.b16 %v854, %v851
        %v930 = vpack.c.b16 %v858, %v855
        %v931 = vpack.c.b16 %v859, %v856
        %v932 = vpack.c.b16 %v860, %v857
        %v933 = vpack.c.b16 %v864, %v861
        %v934 = vpack.c.b16 %v865, %v862
        %v935 = vpack.c.b16 %v866, %v863
        %v936 = vpack.c.b16 %v870, %v867
        %v937 = vpack.c.b16 %v871, %v868
        %v938 = vpack.c.b16 %v872, %v869
        %v939 = vpack.c.b16 %v876, %v873
        %v940 = vpack.c.b16 %v877, %v874
        %v941 = vpack.c.b16 %v878, %v875
        %v942 = vpack.c.b16 %v882, %v879
        %v943 = vpack.c.b16 %v883, %v880
        %v944 = vpack.c.b16 %v884, %v881
        %v945 = vpack.c.b16 %v888, %v885
        %v946 = vpack.c.b16 %v889, %v886
        %v947 = vpack.c.b16 %v890, %v887
        %v948 = vpack.c.b16 %v894, %v891
        %v949 = vpack.c.b16 %v895, %v892
        %v950 = vpack.c.b16 %v896, %v893
        %v951 = vpack.c.b16 %v900, %v897
        %v952 = vpack.c.b16 %v901, %v898
        %v953 = vpack.c.b16 %v902, %v899
        %v954 = vpack.c.b16 %v906, %v903
        %v955 = vpack.c.b16 %v907, %v904
        %v956 = vpack.c.b16 %v908, %v905
        %1005 = vmatprep.subr.bf16.mxu0 %v910
        %1006 = vmatpush1.bf16.msra.mxu0 %v909
        %1007 = vmatprep.subr.bf16.mxu0 %v913
        %1008 = vmatpush1.bf16.msra.mxu0 %v912
        %1009 = vmatprep.subr.bf16.mxu0 %v916
        %1010 = vmatpush1.bf16.msra.mxu0 %v915
        %1011 = vmatprep.subr.bf16.mxu0 %v919
        %1012 = vmatpush1.bf16.msra.mxu0 %v918
        %1013 = vmatprep.subr.bf16.mxu0 %v922
        %1014 = vmatpush1.bf16.msra.mxu0 %v921
        %1015 = vmatprep.subr.bf16.mxu0 %v925
        %1016 = vmatpush1.bf16.msra.mxu0 %v924
        %1017 = vmatprep.subr.bf16.mxu0 %v928
        %1018 = vmatpush1.bf16.msra.mxu0 %v927
        %1019 = vmatprep.subr.bf16.mxu0 %v931
        %1020 = vmatpush1.bf16.msra.mxu0 %v930
        %1021 = vmatprep.subr.bf16.mxu0 %v934
        %1022 = vmatpush1.bf16.msra.mxu0 %v933
        %1023 = vmatprep.subr.bf16.mxu0 %v937
        %1024 = vmatpush1.bf16.msra.mxu0 %v936
        %1025 = vmatprep.subr.bf16.mxu0 %v940
        %1026 = vmatpush1.bf16.msra.mxu0 %v939
        %1027 = vmatprep.subr.bf16.mxu0 %v943
        %1028 = vmatpush1.bf16.msra.mxu0 %v942
        %1029 = vmatprep.subr.bf16.mxu0 %v946
        %1030 = vmatpush1.bf16.msra.mxu0 %v945
        %1031 = vmatprep.subr.bf16.mxu0 %v949
        %1032 = vmatpush1.bf16.msra.mxu0 %v948
        %1033 = vmatprep.subr.bf16.mxu0 %v952
        %1034 = vmatpush1.bf16.msra.mxu0 %v951
        %1035 = vmatprep.subr.bf16.mxu0 %v955
        %1036 = vmatpush1.bf16.msra.mxu0 %v954
        %1037 = vmatprep.mubr.bf16.mxu0 %v684
        %1038 = vmatmul.mubr.bf16.gmra.mrb[0].mxu0 %v683
        %v1039 = vpop.f32.mrb[0].mxu0
        %v1040 = vadd.f32 0.0, %v1039
        %v1041 = vpop.f32.mrb[0].mxu0
        %v1042 = vadd.f32 0.0, %v1041
        %v1043 = vpop.f32.mrb[0].mxu0
        %v1044 = vadd.f32 0.0, %v1043
        %v1045 = vpop.f32.mrb[0].mxu0
        %v1046 = vadd.f32 0.0, %v1045
        %1047 = vdwg.mxu0
        %1048 = vmatprep.subr.bf16.mxu0 0
        %1049 = vmatpush1.bf16.msra.mxu0 %v911
        %1050 = vmatprep.subr.bf16.mxu0 0
        %1051 = vmatpush1.bf16.msra.mxu0 %v914
        %1052 = vmatprep.subr.bf16.mxu0 0
        %1053 = vmatpush1.bf16.msra.mxu0 %v917
        %1054 = vmatprep.subr.bf16.mxu0 0
        %1055 = vmatpush1.bf16.msra.mxu0 %v920
        %1056 = vmatprep.subr.bf16.mxu0 0
        %1057 = vmatpush1.bf16.msra.mxu0 %v923
        %1058 = vmatprep.subr.bf16.mxu0 0
        %1059 = vmatpush1.bf16.msra.mxu0 %v926
        %1060 = vmatprep.subr.bf16.mxu0 0
        %1061 = vmatpush1.bf16.msra.mxu0 %v929
        %1062 = vmatprep.subr.bf16.mxu0 0
        %1063 = vmatpush1.bf16.msra.mxu0 %v932
        %1064 = vmatprep.subr.bf16.mxu0 0
        %1065 = vmatpush1.bf16.msra.mxu0 %v935
        %1066 = vmatprep.subr.bf16.mxu0 0
        %1067 = vmatpush1.bf16.msra.mxu0 %v938
        %1068 = vmatprep.subr.bf16.mxu0 0
        %1069 = vmatpush1.bf16.msra.mxu0 %v941
        %1070 = vmatprep.subr.bf16.mxu0 0
        %1071 = vmatpush1.bf16.msra.mxu0 %v944
        %1072 = vmatprep.subr.bf16.mxu0 0
        %1073 = vmatpush1.bf16.msra.mxu0 %v947
        %1074 = vmatprep.subr.bf16.mxu0 0
        %1075 = vmatpush1.bf16.msra.mxu0 %v950
        %1076 = vmatprep.subr.bf16.mxu0 0
        %1077 = vmatpush1.bf16.msra.mxu0 %v953
        %1078 = vmatprep.subr.bf16.mxu0 0
        %1079 = vmatpush1.bf16.msra.mxu0 %v956
        %1080 = vmatprep.mubr.bf16.mxu0 %v684
        %1081 = vmatmul.mubr.bf16.gmra.mrb[0].mxu0 %v683
        %v1082 = vpop.f32.mrb[0].mxu0
        %v1083 = vadd.f32 0.0, %v1082
        %v1084 = vpop.f32.mrb[0].mxu0
        %v1085 = vpop.f32.mrb[0].mxu0
        %v1086 = vadd.f32 0.0, %v1085
        %v1087 = vpop.f32.mrb[0].mxu0
        %1088 = vdwg.mxu0
        %1089 = vst [vmem:[%s333] sm:$0xff] %v1083
        %1090 = vst [vmem:[%s333 + $0x8] sm:$0xff] %v1086
        %v1091 = vpack.c.bf16 %v1044, %v1040
        %v1092 = vpack.c.bf16 %v1046, %v1042
        %v1093 = vld [vmem:[%s5] sm:$0xf]
        %v1094 = vld [vmem:[%s5 + $0x4] sm:$0xf]
        %v1095 = vld [vmem:[%s5 + $0x8] sm:$0xf]
        %v1096 = vld [vmem:[%s5 + $0xc] sm:$0xf]
        %v1097 = vld [vmem:[%s5 + $0x10] sm:$0xf]
        %v1098 = vld [vmem:[%s5 + $0x14] sm:$0xf]
        %v1099 = vld [vmem:[%s5 + $0x18] sm:$0xf]
        %v1100 = vld [vmem:[%s5 + $0x1c] sm:$0xf]
        %v1101 = vld [vmem:[%s5 + $0x20] sm:$0xf]
        %v1102 = vld [vmem:[%s5 + $0x24] sm:$0xf]
        %v1103 = vld [vmem:[%s5 + $0x28] sm:$0xf]
        %v1104 = vld [vmem:[%s5 + $0x2c] sm:$0xf]
        %v1105 = vld [vmem:[%s5 + $0x30] sm:$0xf]
        %v1106 = vld [vmem:[%s5 + $0x34] sm:$0xf]
        %v1107 = vld [vmem:[%s5 + $0x38] sm:$0xf]
        %v1108 = vld [vmem:[%s5 + $0x3c] sm:$0xf]
        %v1125 = vunpack.c.l.b16 %v1093
        %v1126 = vunpack.c.l.b16 %v1094
        %v1127 = vunpack.c.l.b16 %v1095
        %v1128 = vunpack.c.l.b16 %v1096
        %v1129 = vunpack.c.l.b16 %v1097
        %v1130 = vunpack.c.l.b16 %v1098
        %v1131 = vunpack.c.l.b16 %v1099
        %v1132 = vunpack.c.l.b16 %v1100
        %v1133 = vunpack.c.l.b16 %v1101
        %v1134 = vunpack.c.l.b16 %v1102
        %v1135 = vunpack.c.l.b16 %v1103
        %v1136 = vunpack.c.l.b16 %v1104
        %v1137 = vunpack.c.l.b16 %v1105
        %v1138 = vunpack.c.l.b16 %v1106
        %v1139 = vunpack.c.l.b16 %v1107
        %v1140 = vunpack.c.l.b16 %v1108
        %v1141 = vpack.c.b16 %v1126, %v1125
        %v1142 = vpack.c.b16 %v1128, %v1127
        %v1143 = vpack.c.b16 %v1130, %v1129
        %v1144 = vpack.c.b16 %v1132, %v1131
        %v1145 = vpack.c.b16 %v1134, %v1133
        %v1146 = vpack.c.b16 %v1136, %v1135
        %v1147 = vpack.c.b16 %v1138, %v1137
        %v1148 = vpack.c.b16 %v1140, %v1139
        %vm1149 = vcmask 130048
        %v1151 = vsel %vm1149, %v1141, 0
        %v1154 = vsel %vm1149, %v1142, 0
        %v1157 = vsel %vm1149, %v1143, 0
        %v1160 = vsel %vm1149, %v1144, 0
        %v1163 = vsel %vm1149, %v1145, 0
        %v1166 = vsel %vm1149, %v1146, 0
        %v1169 = vsel %vm1149, %v1147, 0
        %v1172 = vsel %vm1149, %v1148, 0
        %1174 = vmatprep.subr.bf16.mxu0 %v1092
        %1175 = vmatpush1.bf16.msra.mxu0 %v1091
        %1176 = vmatprep.subr.bf16.mxu0 0
        %1177 = vmatpush1.bf16.msra.mxu0 0
        %1178 = vmatprep.subr.bf16.mxu0 0
        %1179 = vmatpush1.bf16.msra.mxu0 0
        %1180 = vmatprep.subr.bf16.mxu0 0
        %1181 = vmatpush1.bf16.msra.mxu0 0
        %1182 = vmatprep.subr.bf16.mxu0 0
        %1183 = vmatpush1.bf16.msra.mxu0 0
        %1184 = vmatprep.subr.bf16.mxu0 0
        %1185 = vmatpush1.bf16.msra.mxu0 0
        %1186 = vmatprep.subr.bf16.mxu0 0
        %1187 = vmatpush1.bf16.msra.mxu0 0
        %1188 = vmatprep.subr.bf16.mxu0 0
        %1189 = vmatpush1.bf16.msra.mxu0 0
        %1190 = vmatprep.subr.bf16.mxu0 0
        %1191 = vmatpush1.bf16.msra.mxu0 0
        %1192 = vmatprep.subr.bf16.mxu0 0
        %1193 = vmatpush1.bf16.msra.mxu0 0
        %1194 = vmatprep.subr.bf16.mxu0 0
        %1195 = vmatpush1.bf16.msra.mxu0 0
        %1196 = vmatprep.subr.bf16.mxu0 0
        %1197 = vmatpush1.bf16.msra.mxu0 0
        %1198 = vmatprep.subr.bf16.mxu0 0
        %1199 = vmatpush1.bf16.msra.mxu0 0
        %1200 = vmatprep.subr.bf16.mxu0 0
        %1201 = vmatpush1.bf16.msra.mxu0 0
        %1202 = vmatprep.subr.bf16.mxu0 0
        %1203 = vmatpush1.bf16.msra.mxu0 0
        %1204 = vmatprep.subr.bf16.mxu0 0
        %1205 = vmatpush1.bf16.msra.mxu0 0
        %1206 = vmatprep.mubr.bf16.mxu0 0
        %1207 = vmatmul.mubr.bf16.gmra.mrb[0].mxu0 %v1151
        %v1208 = vpop.f32.mrb[0].mxu0
        %v1209 = vadd.f32 0.0, %v1208
        %v1210 = vpop.f32.mrb[0].mxu0
        %v1211 = vadd.f32 0.0, %v1210
        %v1212 = vpop.f32.mrb[0].mxu0
        %v1213 = vadd.f32 0.0, %v1212
        %v1214 = vpop.f32.mrb[0].mxu0
        %v1215 = vadd.f32 0.0, %v1214
        %1216 = vmatprep.mubr.bf16.mxu0 0
        %1217 = vmatmul.mubr.bf16.gmra.mrb[0].mxu0 %v1154
        %v1218 = vpop.f32.mrb[0].mxu0
        %v1219 = vadd.f32 0.0, %v1218
        %v1220 = vpop.f32.mrb[0].mxu0
        %v1221 = vadd.f32 0.0, %v1220
        %v1222 = vpop.f32.mrb[0].mxu0
        %v1223 = vadd.f32 0.0, %v1222
        %v1224 = vpop.f32.mrb[0].mxu0
        %v1225 = vadd.f32 0.0, %v1224
        %1226 = vmatprep.mubr.bf16.mxu0 0
        %1227 = vmatmul.mubr.bf16.gmra.mrb[0].mxu0 %v1157
        %v1228 = vpop.f32.mrb[0].mxu0
        %v1229 = vadd.f32 0.0, %v1228
        %v1230 = vpop.f32.mrb[0].mxu0
        %v1231 = vadd.f32 0.0, %v1230
        %v1232 = vpop.f32.mrb[0].mxu0
        %v1233 = vadd.f32 0.0, %v1232
        %v1234 = vpop.f32.mrb[0].mxu0
        %v1235 = vadd.f32 0.0, %v1234
        %1236 = vmatprep.mubr.bf16.mxu0 0
        %1237 = vmatmul.mubr.bf16.gmra.mrb[0].mxu0 %v1160
        %v1238 = vpop.f32.mrb[0].mxu0
        %v1239 = vadd.f32 0.0, %v1238
        %v1240 = vpop.f32.mrb[0].mxu0
        %v1241 = vadd.f32 0.0, %v1240
        %v1242 = vpop.f32.mrb[0].mxu0
        %v1243 = vadd.f32 0.0, %v1242
        %v1244 = vpop.f32.mrb[0].mxu0
        %v1245 = vadd.f32 0.0, %v1244
        %1246 = vmatprep.mubr.bf16.mxu0 0
        %1247 = vmatmul.mubr.bf16.gmra.mrb[0].mxu0 %v1163
        %v1248 = vpop.f32.mrb[0].mxu0
        %v1249 = vadd.f32 0.0, %v1248
        %v1250 = vpop.f32.mrb[0].mxu0
        %v1251 = vadd.f32 0.0, %v1250
        %v1252 = vpop.f32.mrb[0].mxu0
        %v1253 = vadd.f32 0.0, %v1252
        %v1254 = vpop.f32.mrb[0].mxu0
        %v1255 = vadd.f32 0.0, %v1254
        %1256 = vmatprep.mubr.bf16.mxu0 0
        %1257 = vmatmul.mubr.bf16.gmra.mrb[0].mxu0 %v1166
        %v1258 = vpop.f32.mrb[0].mxu0
        %v1259 = vadd.f32 0.0, %v1258
        %v1260 = vpop.f32.mrb[0].mxu0
        %v1261 = vadd.f32 0.0, %v1260
        %v1262 = vpop.f32.mrb[0].mxu0
        %v1263 = vadd.f32 0.0, %v1262
        %v1264 = vpop.f32.mrb[0].mxu0
        %v1265 = vadd.f32 0.0, %v1264
        %1266 = vmatprep.mubr.bf16.mxu0 0
        %1267 = vmatmul.mubr.bf16.gmra.mrb[0].mxu0 %v1169
        %v1268 = vpop.f32.mrb[0].mxu0
        %v1269 = vadd.f32 0.0, %v1268
        %v1270 = vpop.f32.mrb[0].mxu0
        %v1271 = vadd.f32 0.0, %v1270
        %v1272 = vpop.f32.mrb[0].mxu0
        %v1273 = vadd.f32 0.0, %v1272
        %v1274 = vpop.f32.mrb[0].mxu0
        %v1275 = vadd.f32 0.0, %v1274
        %1276 = vmatprep.mubr.bf16.mxu0 0
        %1277 = vmatmul.mubr.bf16.gmra.mrb[0].mxu0 %v1172
        %v1278 = vpop.f32.mrb[0].mxu0
        %v1279 = vadd.f32 0.0, %v1278
        %v1280 = vpop.f32.mrb[0].mxu0
        %v1281 = vadd.f32 0.0, %v1280
        %v1282 = vpop.f32.mrb[0].mxu0
        %v1283 = vadd.f32 0.0, %v1282
        %v1284 = vpop.f32.mrb[0].mxu0
        %v1285 = vadd.f32 0.0, %v1284
        %1286 = vdwg.mxu0
        %v1287 = vld [vmem:[#allocation5] sm:$0xff]
        %v1288 = vld [vmem:[#allocation5 + $0x8] sm:$0xff]
        %v1289 = vld [vmem:[#allocation5 + $0x10] sm:$0xff]
        %v1290 = vld [vmem:[#allocation5 + $0x18] sm:$0xff]
        %v1291 = vld [vmem:[#allocation5 + $0x20] sm:$0xff]
        %v1292 = vld [vmem:[#allocation5 + $0x28] sm:$0xff]
        %v1293 = vld [vmem:[#allocation5 + $0x30] sm:$0xff]
        %v1294 = vld [vmem:[#allocation5 + $0x38] sm:$0xff]
        %v1295 = vld [vmem:[#allocation5 + $0x40] sm:$0xff]
        %v1296 = vld [vmem:[#allocation5 + $0x48] sm:$0xff]
        %v1297 = vld [vmem:[#allocation5 + $0x50] sm:$0xff]
        %v1298 = vld [vmem:[#allocation5 + $0x58] sm:$0xff]
        %v1299 = vld [vmem:[#allocation5 + $0x60] sm:$0xff]
        %v1300 = vld [vmem:[#allocation5 + $0x68] sm:$0xff]
        %v1301 = vld [vmem:[#allocation5 + $0x70] sm:$0xff]
        %v1302 = vld [vmem:[#allocation5 + $0x78] sm:$0xff]
        %v1303 = vunpack.c.l.bf16 %v1287
        %v1304 = vunpack.c.h.bf16 %v1287
        %v1305 = vunpack.c.l.bf16 %v1288
        %v1306 = vunpack.c.h.bf16 %v1288
        %v1307 = vunpack.c.l.bf16 %v1289
        %v1308 = vunpack.c.h.bf16 %v1289
        %v1309 = vunpack.c.l.bf16 %v1290
        %v1310 = vunpack.c.h.bf16 %v1290
        %v1311 = vunpack.c.l.bf16 %v1291
        %v1312 = vunpack.c.h.bf16 %v1291
        %v1313 = vunpack.c.l.bf16 %v1292
        %v1314 = vunpack.c.h.bf16 %v1292
        %v1315 = vunpack.c.l.bf16 %v1293
        %v1316 = vunpack.c.h.bf16 %v1293
        %v1317 = vunpack.c.l.bf16 %v1294
        %v1318 = vunpack.c.h.bf16 %v1294
        %v1319 = vunpack.c.l.bf16 %v1295
        %v1320 = vunpack.c.h.bf16 %v1295
        %v1321 = vunpack.c.l.bf16 %v1296
        %v1322 = vunpack.c.h.bf16 %v1296
        %v1323 = vunpack.c.l.bf16 %v1297
        %v1324 = vunpack.c.h.bf16 %v1297
        %v1325 = vunpack.c.l.bf16 %v1298
        %v1326 = vunpack.c.h.bf16 %v1298
        %v1327 = vunpack.c.l.bf16 %v1299
        %v1328 = vunpack.c.h.bf16 %v1299
        %v1329 = vunpack.c.l.bf16 %v1300
        %v1330 = vunpack.c.h.bf16 %v1300
        %v1331 = vunpack.c.l.bf16 %v1301
        %v1332 = vunpack.c.h.bf16 %v1301
        %v1333 = vunpack.c.l.bf16 %v1302
        %v1334 = vunpack.c.h.bf16 %v1302
        %v1335 = vmul.f32 %v1209, %v1303
        %v1336 = vmul.f32 %v1211, %v1304
        %v1337 = vmul.f32 %v1213, %v1305
        %v1338 = vmul.f32 %v1215, %v1306
        %v1339 = vmul.f32 %v1219, %v1307
        %v1340 = vmul.f32 %v1221, %v1308
        %v1341 = vmul.f32 %v1223, %v1309
        %v1342 = vmul.f32 %v1225, %v1310
        %v1343 = vmul.f32 %v1229, %v1311
        %v1344 = vmul.f32 %v1231, %v1312
        %v1345 = vmul.f32 %v1233, %v1313
        %v1346 = vmul.f32 %v1235, %v1314
        %v1347 = vmul.f32 %v1239, %v1315
        %v1348 = vmul.f32 %v1241, %v1316
        %v1349 = vmul.f32 %v1243, %v1317
        %v1350 = vmul.f32 %v1245, %v1318
        %v1351 = vmul.f32 %v1249, %v1319
        %v1352 = vmul.f32 %v1251, %v1320
        %v1353 = vmul.f32 %v1253, %v1321
        %v1354 = vmul.f32 %v1255, %v1322
        %v1355 = vmul.f32 %v1259, %v1323
        %v1356 = vmul.f32 %v1261, %v1324
        %v1357 = vmul.f32 %v1263, %v1325
        %v1358 = vmul.f32 %v1265, %v1326
        %v1359 = vmul.f32 %v1269, %v1327
        %v1360 = vmul.f32 %v1271, %v1328
        %v1361 = vmul.f32 %v1273, %v1329
        %v1362 = vmul.f32 %v1275, %v1330
        %v1363 = vmul.f32 %v1279, %v1331
        %v1364 = vmul.f32 %v1281, %v1332
        %v1365 = vmul.f32 %v1283, %v1333
        %v1366 = vmul.f32 %v1285, %v1334
        %v1367 = vpack.c.bf16 %v1337, %v1335
        %v1368 = vpack.c.bf16 %v1338, %v1336
        %v1369 = vpack.c.bf16 %v1341, %v1339
        %v1370 = vpack.c.bf16 %v1342, %v1340
        %v1371 = vpack.c.bf16 %v1345, %v1343
        %v1372 = vpack.c.bf16 %v1346, %v1344
        %v1373 = vpack.c.bf16 %v1349, %v1347
        %v1374 = vpack.c.bf16 %v1350, %v1348
        %v1375 = vpack.c.bf16 %v1353, %v1351
        %v1376 = vpack.c.bf16 %v1354, %v1352
        %v1377 = vpack.c.bf16 %v1357, %v1355
        %v1378 = vpack.c.bf16 %v1358, %v1356
        %v1379 = vpack.c.bf16 %v1361, %v1359
        %v1380 = vpack.c.bf16 %v1362, %v1360
        %v1381 = vpack.c.bf16 %v1365, %v1363
        %v1382 = vpack.c.bf16 %v1366, %v1364
        %1383 = vmatprep.subr.bf16.mxu0 %v1368
        %1384 = vmatpush1.bf16.xpose.msra.mxu0 %v1367
        %1385 = vmatprep.subr.bf16.mxu0 %v1370
        %1386 = vmatpush1.bf16.xpose.msra.mxu0 %v1369
        %1387 = vmatprep.subr.bf16.mxu0 %v1372
        %1388 = vmatpush1.bf16.xpose.msra.mxu0 %v1371
        %1389 = vmatprep.subr.bf16.mxu0 %v1374
        %1390 = vmatpush1.bf16.xpose.msra.mxu0 %v1373
        %1391 = vmatprep.subr.bf16.mxu0 %v1376
        %1392 = vmatpush1.bf16.xpose.msra.mxu0 %v1375
        %1393 = vmatprep.subr.bf16.mxu0 %v1378
        %1394 = vmatpush1.bf16.xpose.msra.mxu0 %v1377
        %1395 = vmatprep.subr.bf16.mxu0 %v1380
        %1396 = vmatpush1.bf16.xpose.msra.mxu0 %v1379
        %1397 = vmatprep.subr.bf16.mxu0 %v1382
        %1398 = vmatpush1.bf16.xpose.msra.mxu0 %v1381
        %1399 = vmatprep.subr.bf16.mxu0 0
        %1400 = vmatpush1.bf16.xpose.msra.mxu0 0
        %1401 = vmatprep.subr.bf16.mxu0 0
        %1402 = vmatpush1.bf16.xpose.msra.mxu0 0
        %1403 = vmatprep.subr.bf16.mxu0 0
        %1404 = vmatpush1.bf16.xpose.msra.mxu0 0
        %1405 = vmatprep.subr.bf16.mxu0 0
        %1406 = vmatpush1.bf16.xpose.msra.mxu0 0
        %1407 = vmatprep.subr.bf16.mxu0 0
        %1408 = vmatpush1.bf16.xpose.msra.mxu0 0
        %1409 = vmatprep.subr.bf16.mxu0 0
        %1410 = vmatpush1.bf16.xpose.msra.mxu0 0
        %1411 = vmatprep.subr.bf16.mxu0 0
        %1412 = vmatpush1.bf16.xpose.msra.mxu0 0
        %1413 = vmatprep.subr.bf16.mxu0 0
        %1414 = vmatpush1.bf16.xpose.msra.mxu0 0
        %1415 = vmatprep.mubr.bf16.mxu0 %v1368
        %1416 = vmatmul.mubr.bf16.gmra.mrb[0].mxu0 %v1367
        %v1417 = vpop.f32.mrb[0].mxu0
        %v1418 = vadd.f32 0.0, %v1417
        %v1419 = vpop.f32.mrb[0].mxu0
        %v1420 = vpop.f32.mrb[0].mxu0
        %v1421 = vadd.f32 0.0, %v1420
        %v1422 = vpop.f32.mrb[0].mxu0
        %1423 = vmatprep.mubr.bf16.mxu0 %v1370
        %1424 = vmatmul.mubr.bf16.gmra.mrb[0].mxu0 %v1369
        %v1425 = vpop.f32.mrb[0].mxu0
        %v1426 = vadd.f32 0.0, %v1425
        %v1427 = vpop.f32.mrb[0].mxu0
        %v1428 = vpop.f32.mrb[0].mxu0
        %v1429 = vadd.f32 0.0, %v1428
        %v1430 = vpop.f32.mrb[0].mxu0
        %1431 = vmatprep.mubr.bf16.mxu0 %v1372
        %1432 = vmatmul.mubr.bf16.gmra.mrb[0].mxu0 %v1371
        %v1433 = vpop.f32.mrb[0].mxu0
        %v1434 = vadd.f32 0.0, %v1433
        %v1435 = vpop.f32.mrb[0].mxu0
        %v1436 = vpop.f32.mrb[0].mxu0
        %v1437 = vadd.f32 0.0, %v1436
        %v1438 = vpop.f32.mrb[0].mxu0
        %1439 = vmatprep.mubr.bf16.mxu0 %v1374
        %1440 = vmatmul.mubr.bf16.gmra.mrb[0].mxu0 %v1373
        %v1441 = vpop.f32.mrb[0].mxu0
        %v1442 = vadd.f32 0.0, %v1441
        %v1443 = vpop.f32.mrb[0].mxu0
        %v1444 = vpop.f32.mrb[0].mxu0
        %v1445 = vadd.f32 0.0, %v1444
        %v1446 = vpop.f32.mrb[0].mxu0
        %1447 = vmatprep.mubr.bf16.mxu0 %v1376
        %1448 = vmatmul.mubr.bf16.gmra.mrb[0].mxu0 %v1375
        %v1449 = vpop.f32.mrb[0].mxu0
        %v1450 = vadd.f32 0.0, %v1449
        %v1451 = vpop.f32.mrb[0].mxu0
        %v1452 = vpop.f32.mrb[0].mxu0
        %v1453 = vadd.f32 0.0, %v1452
        %v1454 = vpop.f32.mrb[0].mxu0
        %1455 = vmatprep.mubr.bf16.mxu0 %v1378
        %1456 = vmatmul.mubr.bf16.gmra.mrb[0].mxu0 %v1377
        %v1457 = vpop.f32.mrb[0].mxu0
        %v1458 = vadd.f32 0.0, %v1457
        %v1459 = vpop.f32.mrb[0].mxu0
        %v1460 = vpop.f32.mrb[0].mxu0
        %v1461 = vadd.f32 0.0, %v1460
        %v1462 = vpop.f32.mrb[0].mxu0
        %1463 = vmatprep.mubr.bf16.mxu0 %v1380
        %1464 = vmatmul.mubr.bf16.gmra.mrb[0].mxu0 %v1379
        %v1465 = vpop.f32.mrb[0].mxu0
        %v1466 = vadd.f32 0.0, %v1465
        %v1467 = vpop.f32.mrb[0].mxu0
        %v1468 = vpop.f32.mrb[0].mxu0
        %v1469 = vadd.f32 0.0, %v1468
        %v1470 = vpop.f32.mrb[0].mxu0
        %1471 = vmatprep.mubr.bf16.mxu0 %v1382
        %1472 = vmatmul.mubr.bf16.gmra.mrb[0].mxu0 %v1381
        %v1473 = vpop.f32.mrb[0].mxu0
        %v1474 = vadd.f32 0.0, %v1473
        %v1475 = vpop.f32.mrb[0].mxu0
        %v1476 = vpop.f32.mrb[0].mxu0
        %v1477 = vadd.f32 0.0, %v1476
        %v1478 = vpop.f32.mrb[0].mxu0
        %1479 = vdwg.mxu0
        %1480 = vst [vmem:[%s340] sm:$0xff] %v1418
        %1481 = vst [vmem:[%s340 + $0x8] sm:$0xff] %v1421
        %1482 = vst [vmem:[%s340 + $0x10] sm:$0xff] %v1426
        %1483 = vst [vmem:[%s340 + $0x18] sm:$0xff] %v1429
        %1484 = vst [vmem:[%s340 + $0x20] sm:$0xff] %v1434
        %1485 = vst [vmem:[%s340 + $0x28] sm:$0xff] %v1437
        %1486 = vst [vmem:[%s340 + $0x30] sm:$0xff] %v1442
        %1487 = vst [vmem:[%s340 + $0x38] sm:$0xff] %v1445
        %1488 = vst [vmem:[%s340 + $0x40] sm:$0xff] %v1450
        %1489 = vst [vmem:[%s340 + $0x48] sm:$0xff] %v1453
        %1490 = vst [vmem:[%s340 + $0x50] sm:$0xff] %v1458
        %1491 = vst [vmem:[%s340 + $0x58] sm:$0xff] %v1461
        %1492 = vst [vmem:[%s340 + $0x60] sm:$0xff] %v1466
        %1493 = vst [vmem:[%s340 + $0x68] sm:$0xff] %v1469
        %1494 = vst [vmem:[%s340 + $0x70] sm:$0xff] %v1474
        %1495 = vst [vmem:[%s340 + $0x78] sm:$0xff] %v1477
        %s1496 = sand.u32 %s188, 1
        %s1497 = scalar_lea.sflag [#allocation4], %s1496
        %s1498 = sand.u32 %s188, 1
        %s1499 = smul.addr %s1498, 16
        %s1500 = scalar_lea.vmem [#allocation7], %s1499
        %s1501 = sand.u32 %s214, 1
        %s1502 = scalar_lea.sflag [#allocation9], %s1501
        %s1503 = sand.u32 %s214, 1
        %s1504 = smul.addr %s1503, 128
        %s1505 = scalar_lea.vmem [#allocation8], %s1504
        // Predicated region
        $region57: #{tpu_custom_call.1} parent=47 // pred_check
          %p1506 = pneg %p198
        $region58: #{tpu_custom_call.1} parent=47 // pred_check_branch
          %1508 = sbr.rel (%p1506) target = $region60
        $region59: #{tpu_custom_call.1} parent=47 // pred_region
          %s1509 = smul.u32 2, %s28
          %s1511 = ssub.s32 256, 256
          %1512 = vsyncadd %s1497, %s1511
          %s1513 = smul.addr %s1509, 128
          %s1514 = scalar_lea.hbm %s7, %s1513
          %s1515 = sshll.u32 %s1500, 4
          %s1516 = int_to_ptr.vmem [resolvable:$true] %s1515
          %1521 = dma.vmem_to_hbm [thread:$0]  %s1516, 256, %s1514, %s1497, 128, 128, 8
        $region60: #{tpu_custom_call.1} parent=47 // pred_fallthru
          _
        // Predicated region
        $region61: #{tpu_custom_call.1} parent=47 // pred_check
          %p1522 = pneg %p224
        $region62: #{tpu_custom_call.1} parent=47 // pred_check_branch
          %1524 = sbr.rel (%p1522) target = $region64
        $region63: #{tpu_custom_call.1} parent=47 // pred_region
          %s1525 = smul.u32 16, %s28
          %s1527 = ssub.s32 2048, 2048
          %1528 = vsyncadd %s1502, %s1527
          %s1529 = smul.addr %s1525, 128
          %s1530 = scalar_lea.hbm %s8, %s1529
          %s1531 = sshll.u32 %s1505, 4
          %s1532 = int_to_ptr.vmem [resolvable:$true] %s1531
          %1537 = dma.vmem_to_hbm [thread:$0]  %s1532, 2048, %s1530, %s1502, 128, 128, 8
        $region64: #{tpu_custom_call.1} parent=47 // pred_fallthru
          _
      $region48: #{tpu_custom_call.1} parent=5 // pred_fallthru
        _
      %p1538 = scmp.le.s32.totalorder 2, %s23
      // Predicated region
      $region65: #{tpu_custom_call.1} parent=5 // pred_check
        %p1539 = pneg %p1538
      $region66: #{tpu_custom_call.1} parent=5 // pred_check_branch
        %1541 = sbr.rel (%p1539) target = $region68
      $region67: #{tpu_custom_call.1} parent=5 // pred_region
        %s1542 = ssub.s32 %s23, 2
        // Predicated region
        $region69: #{tpu_custom_call.1} parent=67 // pred_check
          %p1543 = pneg %p204
        $region70: #{tpu_custom_call.1} parent=67 // pred_check_branch
          %1545 = sbr.rel (%p1543) target = $region72
        $region71: #{tpu_custom_call.1} parent=67 // pred_region
          %s1546 = sand.u32 %s189, 1
          %s1547 = scalar_lea.sflag [#allocation4], %s1546
          %s1548 = sand.u32 %s189, 1
          %s1549 = smul.addr %s1548, 16
          %s1550 = scalar_lea.vmem [#allocation7], %s1549
          %1551 = dma.done %s1547, 256
        $region72: #{tpu_custom_call.1} parent=67 // pred_fallthru
          _
        // Predicated region
        $region73: #{tpu_custom_call.1} parent=67 // pred_check
          %p1552 = pneg %p230
        $region74: #{tpu_custom_call.1} parent=67 // pred_check_branch
          %1554 = sbr.rel (%p1552) target = $region76
        $region75: #{tpu_custom_call.1} parent=67 // pred_region
          %s1555 = sand.u32 %s215, 1
          %s1556 = scalar_lea.sflag [#allocation9], %s1555
          %s1557 = sand.u32 %s215, 1
          %s1558 = smul.addr %s1557, 128
          %s1559 = scalar_lea.vmem [#allocation8], %s1558
          %1560 = dma.done %s1556, 2048
        $region76: #{tpu_custom_call.1} parent=67 // pred_fallthru
          _
      $region68: #{tpu_custom_call.1} parent=5 // pred_fallthru
        _
    $region6: #{tpu_custom_call.1} parent=1 // loop_footer
      %s27 = sadd.s32 1, %s23
    $region7: #{tpu_custom_call.1} parent=1 // loop_footer_branch
      %22 = sbr.rel target = $region3
    $region8: #{tpu_custom_call.1} parent=1 // loop_exit
      _
    %1561 = vsyncpa [#allocation3], 1
    %s1562 = scalar_lea.sflag [#allocation3], 1
    %1563 = vsyncpa %s1562, 1
    %1564 = vsyncpa [#allocation6], 1
    %1565 = vsyncpa [#allocation4], 1
    %s1566 = scalar_lea.sflag [#allocation4], 1
    %1567 = vsyncpa %s1566, 1
    %1568 = vsyncpa [#allocation9], 1
    %s1569 = scalar_lea.sflag [#allocation9], 1
    %1570 = vsyncpa %s1569, 1

</llo_original>
